<compile_context>
chip_gen: v7x
topology: tpu7x:2x2x1
jax: 0.10.0
libtpu: 0.0.40
codegen_flags: <defaults>
</compile_context>

<pallas_src>
import functools

import jax
import jax.numpy as jnp
from jax.experimental import pallas as pl
from jax.experimental.pallas import tpu as pltpu

IN_DIM = 28 * 28      # 784
HID = 64
OUT = 10
PAD = 128             # lane-dense padded feature dim for hidden/output


def _round_up(n, m):
    return ((n + m - 1) // m) * m


def _mlp_kernel(x_ref, w1_ref, b1_ref, w2_ref, b2_ref,
                w3_ref, b3_ref, w4_ref, b4_ref, o_ref):
    # In-kernel bf16 cast of x (no-op if the caller already supplied bf16): avoids a
    # separate wrapper-side HBM cast pass over the largest operand.
    x = x_ref[...].astype(jnp.bfloat16)
    # Layer 1: (TB,784) @ (784,128) -> f32 MXU acc, +bias (f32), ReLU, bf16 for next pass
    h = jnp.dot(x, w1_ref[...], preferred_element_type=jnp.float32)
    h = jnp.maximum(h + b1_ref[...], 0.0).astype(jnp.bfloat16)
    # Layer 2: (TB,128) @ (128,128)
    h = jnp.dot(h, w2_ref[...], preferred_element_type=jnp.float32)
    h = jnp.maximum(h + b2_ref[...], 0.0).astype(jnp.bfloat16)
    # Layer 3
    h = jnp.dot(h, w3_ref[...], preferred_element_type=jnp.float32)
    h = jnp.maximum(h + b3_ref[...], 0.0).astype(jnp.bfloat16)
    # Layer 4 (no ReLU); lanes [10:128] carry exact zeros; stored lane-dense as bf16
    h = jnp.dot(h, w4_ref[...], preferred_element_type=jnp.float32)
    o_ref[...] = (h + b4_ref[...]).astype(o_ref.dtype)


def prepare_params(params):
    """Zero-pad hidden/output dims to 128 lanes and cast weights to bf16.

    Zero-padding is exact: padded hidden units see zero weight columns and zero bias
    -> ReLU(0)=0, and their zero rows in the next weight matrix contribute nothing
    downstream. Padded output lanes equal b4's zero padding and are sliced off in the
    wrapper. Biases stay f32 (added to the f32 accumulator).
    """
    def pad_w(w, rows, cols):
        return jnp.pad(w, ((0, rows - w.shape[0]), (0, cols - w.shape[1])))

    def pad_b(b, cols):
        return jnp.pad(b, ((0, 0), (0, cols - b.shape[1])))

    return dict(
        w1=pad_w(params["w1"], IN_DIM, PAD).astype(jnp.bfloat16),
        b1=pad_b(params["b1"], PAD).astype(jnp.float32),
        w2=pad_w(params["w2"], PAD, PAD).astype(jnp.bfloat16),
        b2=pad_b(params["b2"], PAD).astype(jnp.float32),
        w3=pad_w(params["w3"], PAD, PAD).astype(jnp.bfloat16),
        b3=pad_b(params["b3"], PAD).astype(jnp.float32),
        w4=pad_w(params["w4"], PAD, PAD).astype(jnp.bfloat16),
        b4=pad_b(params["b4"], PAD).astype(jnp.float32),
    )


@functools.partial(jax.jit, static_argnames=("tile_b",))
def quantized_very_net(x, prepped, *, tile_b=1024):
    """x: (B, 784) float32 (or bfloat16, produced upstream). Returns (B, 10) float32."""
    B = x.shape[0]
    # Batch tile: as large as requested, but keep >= 2 grid steps (v7x megacore) and
    # 16-row alignment (bf16 packs two rows per sublane).
    tb = max(16, min(tile_b, _round_up(pl.cdiv(B, 2), 16)))
    grid = (pl.cdiv(B, tb),)   # last block may be partial; OOB rows are dropped on store

    w1, b1 = prepped["w1"], prepped["b1"]
    w2, b2 = prepped["w2"], prepped["b2"]
    w3, b3 = prepped["w3"], prepped["b3"]
    w4, b4 = prepped["w4"], prepped["b4"]

    x_spec = pl.BlockSpec((tb, IN_DIM), lambda i: (i, 0))
    o_spec = pl.BlockSpec((tb, PAD), lambda i: (i, 0))
    # Weights/biases: same full block every grid step -> VMEM-resident, DMA'd once.
    res = lambda shape: pl.BlockSpec(shape, lambda i, _s=shape: tuple(0 for _ in _s))

    param_bytes = sum(int(v.size) * v.dtype.itemsize for v in prepped.values())
    ce = pl.CostEstimate(
        flops=2 * B * (IN_DIM * PAD + 3 * PAD * PAD),
        transcendentals=0,
        bytes_accessed=B * IN_DIM * x.dtype.itemsize + param_bytes + B * PAD * 2,
    )

    out = pl.pallas_call(
        _mlp_kernel,
        out_shape=jax.ShapeDtypeStruct((B, PAD), jnp.bfloat16),
        grid_spec=pltpu.PrefetchScalarGridSpec(
            num_scalar_prefetch=0,
            grid=grid,
            in_specs=[
                x_spec,
                res(w1.shape), res(b1.shape),
                res(w2.shape), res(b2.shape),
                res(w3.shape), res(b3.shape),
                res(w4.shape), res(b4.shape),
            ],
            out_specs=o_spec,
        ),
        compiler_params=pltpu.CompilerParams(
            dimension_semantics=("parallel",)),
        cost_estimate=ce,
    )(x, w1, b1, w2, b2, w3, b3, w4, b4)

    # Only lanes [0, 10) are real; callers get f32 like the PyTorch module.
    return out[:, :OUT].astype(jnp.float32)


def init_params(key):
    """Deterministic init matching nn.Linear shapes (stored transposed: (in,out))."""
    dims = [(IN_DIM, HID), (HID, HID), (HID, HID), (HID, OUT)]
    params = {}
    for i, (fan_in, fan_out) in enumerate(dims, start=1):
        key, kw, kb = jax.random.split(key, 3)
        bound = 1.0 / jnp.sqrt(fan_in)  # PyTorch nn.Linear uniform(-1/sqrt(in), 1/sqrt(in))
        params[f"w{i}"] = jax.random.uniform(
            kw, (fan_in, fan_out), jnp.float32, -bound, bound)
        params[f"b{i}"] = jax.random.uniform(
            kb, (1, fan_out), jnp.float32, -bound, bound)
    return params


def reference_fp32(x, p):
    h = jnp.maximum(x @ p["w1"] + p["b1"], 0.0)
    h = jnp.maximum(h @ p["w2"] + p["b2"], 0.0)
    h = jnp.maximum(h @ p["w3"] + p["b3"], 0.0)
    return h @ p["w4"] + p["b4"]


def reference_bf16(x, p):
    """Mirrors the kernel's bf16-operand / f32-accumulate arithmetic (pre output-rounding)."""
    def lin(h, w, b):
        return jnp.dot(h.astype(jnp.bfloat16), w.astype(jnp.bfloat16),
                       preferred_element_type=jnp.float32) + b
    h = jnp.maximum(lin(x, p["w1"], p["b1"]), 0.0)
    h = jnp.maximum(lin(h, p["w2"], p["b2"]), 0.0)
    h = jnp.maximum(lin(h, p["w3"], p["b3"]), 0.0)
    return lin(h, p["w4"], p["b4"])


if __name__ == "__main__":
    key = jax.random.PRNGKey(0)
    kx, kp = jax.random.split(key)
    params = init_params(kp)
    prepped = prepare_params(params)

    # B=160: two full 80-row tiles (>=2 grid steps). B=52: exercises the partial
    # last block (20 valid rows of a 32-row tile) with no wrapper-side padding pass.
    for B in (160, 52):
        x = jax.random.normal(kx, (B, IN_DIM), jnp.float32)
        out = jax.block_until_ready(quantized_very_net(x, prepped))
        assert out.shape == (B, OUT)

        # Tight check against a reference using the same bf16/f32 arithmetic
        # (tolerance covers the final bf16 output rounding).
        ref16 = reference_bf16(x, params)
        err16 = float(jnp.max(jnp.abs(out - ref16)))
        assert jnp.allclose(out, ref16, atol=2e-2, rtol=2e-2), \
            f"B={B}: max bf16-ref err {err16}"

        # Sanity check against the fp32 PyTorch-equivalent forward (bf16 tolerance).
        ref32 = reference_fp32(x, params)
        err32 = float(jnp.max(jnp.abs(out - ref32)))
        assert jnp.allclose(out, ref32, atol=6e-2, rtol=6e-2), \
            f"B={B}: max fp32-ref err {err32}"

    print("KERNEL_OK")
</pallas_src>

<mosaic_0001>
module attributes {stable_mosaic.version = 11 : i64} {
  func.func @_mlp_kernel(%arg0: i32, %arg1: memref<80x784xf32, #tpu.memory_space<vmem>>, %arg2: memref<784x128xbf16, #tpu.memory_space<vmem>>, %arg3: memref<1x128xf32, #tpu.memory_space<vmem>>, %arg4: memref<128x128xbf16, #tpu.memory_space<vmem>>, %arg5: memref<1x128xf32, #tpu.memory_space<vmem>>, %arg6: memref<128x128xbf16, #tpu.memory_space<vmem>>, %arg7: memref<1x128xf32, #tpu.memory_space<vmem>>, %arg8: memref<128x128xbf16, #tpu.memory_space<vmem>>, %arg9: memref<1x128xf32, #tpu.memory_space<vmem>>, %arg10: memref<80x128xbf16, #tpu.memory_space<vmem>>) attributes {dimension_semantics = [#tpu.dimension_semantics<parallel>], iteration_bounds = array<i64: 2>, scalar_prefetch = 0 : i64, scratch_operands = 0 : i64, tpu.core_type = #tpu.core_type<tc>, window_params = [{transform_indices = @transform_0, window_bounds = array<i64: 80, 784>}, {pipeline_mode = #tpu.pipeline_mode<synchronous>, transform_indices = @transform_1, window_bounds = array<i64: 784, 128>}, {pipeline_mode = #tpu.pipeline_mode<synchronous>, transform_indices = @transform_2, window_bounds = array<i64: 1, 128>}, {pipeline_mode = #tpu.pipeline_mode<synchronous>, transform_indices = @transform_3, window_bounds = array<i64: 128, 128>}, {pipeline_mode = #tpu.pipeline_mode<synchronous>, transform_indices = @transform_4, window_bounds = array<i64: 1, 128>}, {pipeline_mode = #tpu.pipeline_mode<synchronous>, transform_indices = @transform_5, window_bounds = array<i64: 128, 128>}, {pipeline_mode = #tpu.pipeline_mode<synchronous>, transform_indices = @transform_6, window_bounds = array<i64: 1, 128>}, {pipeline_mode = #tpu.pipeline_mode<synchronous>, transform_indices = @transform_7, window_bounds = array<i64: 128, 128>}, {pipeline_mode = #tpu.pipeline_mode<synchronous>, transform_indices = @transform_8, window_bounds = array<i64: 1, 128>}, {transform_indices = @transform_9, window_bounds = array<i64: 80, 128>}]} {
    %c0 = arith.constant 0 : index
    %c0_0 = arith.constant 0 : index
    %0 = vector.load %arg1[%c0, %c0_0] : memref<80x784xf32, #tpu.memory_space<vmem>>, vector<80x784xf32>
    %1 = arith.truncf %0 : vector<80x784xf32> to vector<80x784xbf16>
    %c0_1 = arith.constant 0 : index
    %c0_2 = arith.constant 0 : index
    %2 = vector.load %arg2[%c0_1, %c0_2] : memref<784x128xbf16, #tpu.memory_space<vmem>>, vector<784x128xbf16>
    %cst = arith.constant dense<0.000000e+00> : vector<80x128xf32>
    %3 = tpu.matmul %1, %2, %cst {dimension_numbers = #tpu.dot_dimension_numbers<[1], [0], [0], [1], [0, 0, 1, 1], [], []>} : vector<80x784xbf16>, vector<784x128xbf16>, vector<80x128xf32> -> vector<80x128xf32>
    %c0_3 = arith.constant 0 : index
    %c0_4 = arith.constant 0 : index
    %4 = vector.load %arg3[%c0_3, %c0_4] : memref<1x128xf32, #tpu.memory_space<vmem>>, vector<1x128xf32>
    %5 = vector.broadcast %4 : vector<1x128xf32> to vector<80x128xf32>
    %6 = arith.addf %3, %5 : vector<80x128xf32>
    %cst_5 = arith.constant 0.000000e+00 : f32
    %7 = vector.broadcast %cst_5 : f32 to vector<80x128xf32>
    %8 = arith.maximumf %6, %7 : vector<80x128xf32>
    %9 = arith.truncf %8 : vector<80x128xf32> to vector<80x128xbf16>
    %c0_6 = arith.constant 0 : index
    %c0_7 = arith.constant 0 : index
    %10 = vector.load %arg4[%c0_6, %c0_7] : memref<128x128xbf16, #tpu.memory_space<vmem>>, vector<128x128xbf16>
    %cst_8 = arith.constant dense<0.000000e+00> : vector<80x128xf32>
    %11 = tpu.matmul %9, %10, %cst_8 {dimension_numbers = #tpu.dot_dimension_numbers<[1], [0], [0], [1], [0, 0, 1, 1], [], []>} : vector<80x128xbf16>, vector<128x128xbf16>, vector<80x128xf32> -> vector<80x128xf32>
    %c0_9 = arith.constant 0 : index
    %c0_10 = arith.constant 0 : index
    %12 = vector.load %arg5[%c0_9, %c0_10] : memref<1x128xf32, #tpu.memory_space<vmem>>, vector<1x128xf32>
    %13 = vector.broadcast %12 : vector<1x128xf32> to vector<80x128xf32>
    %14 = arith.addf %11, %13 : vector<80x128xf32>
    %cst_11 = arith.constant 0.000000e+00 : f32
    %15 = vector.broadcast %cst_11 : f32 to vector<80x128xf32>
    %16 = arith.maximumf %14, %15 : vector<80x128xf32>
    %17 = arith.truncf %16 : vector<80x128xf32> to vector<80x128xbf16>
    %c0_12 = arith.constant 0 : index
    %c0_13 = arith.constant 0 : index
    %18 = vector.load %arg6[%c0_12, %c0_13] : memref<128x128xbf16, #tpu.memory_space<vmem>>, vector<128x128xbf16>
    %cst_14 = arith.constant dense<0.000000e+00> : vector<80x128xf32>
    %19 = tpu.matmul %17, %18, %cst_14 {dimension_numbers = #tpu.dot_dimension_numbers<[1], [0], [0], [1], [0, 0, 1, 1], [], []>} : vector<80x128xbf16>, vector<128x128xbf16>, vector<80x128xf32> -> vector<80x128xf32>
    %c0_15 = arith.constant 0 : index
    %c0_16 = arith.constant 0 : index
    %20 = vector.load %arg7[%c0_15, %c0_16] : memref<1x128xf32, #tpu.memory_space<vmem>>, vector<1x128xf32>
    %21 = vector.broadcast %20 : vector<1x128xf32> to vector<80x128xf32>
    %22 = arith.addf %19, %21 : vector<80x128xf32>
    %cst_17 = arith.constant 0.000000e+00 : f32
    %23 = vector.broadcast %cst_17 : f32 to vector<80x128xf32>
    %24 = arith.maximumf %22, %23 : vector<80x128xf32>
    %25 = arith.truncf %24 : vector<80x128xf32> to vector<80x128xbf16>
    %c0_18 = arith.constant 0 : index
    %c0_19 = arith.constant 0 : index
    %26 = vector.load %arg8[%c0_18, %c0_19] : memref<128x128xbf16, #tpu.memory_space<vmem>>, vector<128x128xbf16>
    %cst_20 = arith.constant dense<0.000000e+00> : vector<80x128xf32>
    %27 = tpu.matmul %25, %26, %cst_20 {dimension_numbers = #tpu.dot_dimension_numbers<[1], [0], [0], [1], [0, 0, 1, 1], [], []>} : vector<80x128xbf16>, vector<128x128xbf16>, vector<80x128xf32> -> vector<80x128xf32>
    %c0_21 = arith.constant 0 : index
    %c0_22 = arith.constant 0 : index
    %28 = vector.load %arg9[%c0_21, %c0_22] : memref<1x128xf32, #tpu.memory_space<vmem>>, vector<1x128xf32>
    %29 = vector.broadcast %28 : vector<1x128xf32> to vector<80x128xf32>
    %30 = arith.addf %27, %29 : vector<80x128xf32>
    %31 = arith.truncf %30 : vector<80x128xf32> to vector<80x128xbf16>
    %c0_23 = arith.constant 0 : index
    %c0_24 = arith.constant 0 : index
    %32 = vector.load %arg10[%c0_23, %c0_24] : memref<80x128xbf16, #tpu.memory_space<vmem>>, vector<80x128xbf16>
    tpu.vector_store %arg10[%c0_23, %c0_24], %31 {strides = array<i32>} : memref<80x128xbf16, #tpu.memory_space<vmem>>, vector<80x128xbf16>,
    return
  }
  func.func @transform_0(%arg0: i32) -> (i32, i32) {
    %c0_i32 = arith.constant 0 : i32
    %c0_i32_0 = arith.constant 0 : i32
    return %arg0, %c0_i32 : i32, i32
  }
  func.func @transform_1(%arg0: i32) -> (i32, i32) {
    %c0_i32 = arith.constant 0 : i32
    %c0_i32_0 = arith.constant 0 : i32
    %c0_i32_1 = arith.constant 0 : i32
    return %c0_i32, %c0_i32_0 : i32, i32
  }
  func.func @transform_2(%arg0: i32) -> (i32, i32) {
    %c0_i32 = arith.constant 0 : i32
    %c0_i32_0 = arith.constant 0 : i32
    %c0_i32_1 = arith.constant 0 : i32
    return %c0_i32, %c0_i32_0 : i32, i32
  }
  func.func @transform_3(%arg0: i32) -> (i32, i32) {
    %c0_i32 = arith.constant 0 : i32
    %c0_i32_0 = arith.constant 0 : i32
    %c0_i32_1 = arith.constant 0 : i32
    return %c0_i32, %c0_i32_0 : i32, i32
  }
  func.func @transform_4(%arg0: i32) -> (i32, i32) {
    %c0_i32 = arith.constant 0 : i32
    %c0_i32_0 = arith.constant 0 : i32
    %c0_i32_1 = arith.constant 0 : i32
    return %c0_i32, %c0_i32_0 : i32, i32
  }
  func.func @transform_5(%arg0: i32) -> (i32, i32) {
    %c0_i32 = arith.constant 0 : i32
    %c0_i32_0 = arith.constant 0 : i32
    %c0_i32_1 = arith.constant 0 : i32
    return %c0_i32, %c0_i32_0 : i32, i32
  }
  func.func @transform_6(%arg0: i32) -> (i32, i32) {
    %c0_i32 = arith.constant 0 : i32
    %c0_i32_0 = arith.constant 0 : i32
    %c0_i32_1 = arith.constant 0 : i32
    return %c0_i32, %c0_i32_0 : i32, i32
  }
  func.func @transform_7(%arg0: i32) -> (i32, i32) {
    %c0_i32 = arith.constant 0 : i32
    %c0_i32_0 = arith.constant 0 : i32
    %c0_i32_1 = arith.constant 0 : i32
    return %c0_i32, %c0_i32_0 : i32, i32
  }
  func.func @transform_8(%arg0: i32) -> (i32, i32) {
    %c0_i32 = arith.constant 0 : i32
    %c0_i32_0 = arith.constant 0 : i32
    %c0_i32_1 = arith.constant 0 : i32
    return %c0_i32, %c0_i32_0 : i32, i32
  }
  func.func @transform_9(%arg0: i32) -> (i32, i32) {
    %c0_i32 = arith.constant 0 : i32
    %c0_i32_0 = arith.constant 0 : i32
    return %arg0, %c0_i32 : i32, i32
  }
}

</mosaic_0001>

<llo_original>
// kernel: quantized_very_net.1
$region0: #{quantized_very_net.1}
  #allocation0 [shape = 'u32[]', space=smem, size = 0x4, offset = 0x4, fixed_abs, tag = 'smem constant byte address 0x4 - core index']
  #allocation1 [shape = 'u32[144,128]{1,0:T(1,128)}', space=vmem, size = 0x12000, scoped, tag = 'internal scratch']
  %s0 = inlined_call_operand.hbm [shape: f32[160,784], index: 0, kind: input, shape index: {}]
  %s1 = inlined_call_operand.hbm [shape: bf16[784,128], index: 1, kind: input, shape index: {}]
  %s2 = inlined_call_operand.vmem [shape: f32[1,128], index: 2, kind: input, shape index: {}]
  %s3 = inlined_call_operand.hbm [shape: bf16[128,128], index: 3, kind: input, shape index: {}]
  %s4 = inlined_call_operand.vmem [shape: f32[1,128], index: 4, kind: input, shape index: {}]
  %s5 = inlined_call_operand.hbm [shape: bf16[128,128], index: 5, kind: input, shape index: {}]
  %s6 = inlined_call_operand.vmem [shape: f32[1,128], index: 6, kind: input, shape index: {}]
  %s7 = inlined_call_operand.hbm [shape: bf16[128,128], index: 7, kind: input, shape index: {}]
  %s8 = inlined_call_operand.vmem [shape: f32[1,128], index: 8, kind: input, shape index: {}]
  %s9 = inlined_call_operand.vmem [shape: bf16[160,128], index: 9, kind: output, shape index: {}]
  %s10 = sld [smem:[#allocation0]]
  $region89: #{quantized_very_net.1} parent=0
    _
  %s12 = ssub.s32 1, %s10
  %s13 = scalar_select 0, %s12, %s10
  $region1: #{quantized_very_net.1} parent=0
    #allocation2 [shape = 'u8[573440]{0}', space=vmem, size = 0x8c000, scoped, tag = 'input window, operand 0']
    #allocation3 [shape = 's32[2]{0}', space=sflag, size = 0x8, scoped, tag = 'scoped memory for quantized_very_net.1']
    #allocation4 [shape = 'u8[200704]{0}', space=vmem, size = 0x31000, scoped, tag = 'input window, operand 1, single buffered']
    #allocation5 [shape = 's32[1]{0}', space=sflag, size = 0x4, scoped, tag = 'scoped memory for quantized_very_net.1']
    #allocation6 [shape = 'u8[32768]{0}', space=vmem, size = 0x8000, scoped, tag = 'input window, operand 3, single buffered']
    #allocation7 [shape = 'u8[32768]{0}', space=vmem, size = 0x8000, scoped, tag = 'input window, operand 5, single buffered']
    #allocation8 [shape = 's32[1]{0}', space=sflag, size = 0x4, scoped, tag = 'scoped memory for quantized_very_net.1']
    #allocation9 [shape = 'u8[32768]{0}', space=vmem, size = 0x8000, scoped, tag = 'input window, operand 7, single buffered']
    %14 = vsyncpa [#allocation3], 0
    %s15 = scalar_lea.sflag [#allocation3], 1
    %16 = vsyncpa %s15, 0
    %17 = vsyncpa [#allocation5], 0
    %18 = vsyncpa [#allocation8], 0
    loop: start=0, step=1, limit=4
    $region2: #{quantized_very_net.1} parent=1 // loop_pre_header
      _
    $region3: #{quantized_very_net.1} parent=1 // loop_header
      %s20 = sphi 0, %s24
      %p21 = scmp.ge.s32.totalorder %s20, 4
      %s30 = sphi 0, %s32
      %s33 = sphi 0, %s30
      %s34 = sphi 0, %s33
      %s50 = sphi 0, %s34
      %s54 = sphi 0, %s54
      %s56 = sphi 0, %s54
      %s57 = sphi 0, %s56
      %s71 = sphi 0, %s57
      %s75 = sphi 0, %s75
      %s77 = sphi 0, %s75
      %s78 = sphi 0, %s77
      %s92 = sphi 0, %s78
      %s96 = sphi 0, %s96
      %s98 = sphi 0, %s96
      %s99 = sphi 0, %s98
      %s113 = sphi 0, %s99
      %s117 = sphi 0, %s117
      %s119 = sphi 0, %s117
      %s120 = sphi 0, %s119
      %s134 = sphi 0, %s120
      %s138 = sphi 0, %s138
      %s140 = sphi 0, %s138
      %s141 = sphi 0, %s140
      %s155 = sphi 0, %s141
      %s159 = sphi 0, %s159
      %s161 = sphi 0, %s159
      %s162 = sphi 0, %s161
      %s176 = sphi 0, %s162
      %s180 = sphi 0, %s180
      %s182 = sphi 0, %s180
      %s183 = sphi 0, %s182
      %s197 = sphi 0, %s183
      %s201 = sphi 0, %s201
      %s203 = sphi 0, %s201
      %s204 = sphi 0, %s203
      %s218 = sphi 0, %s204
      %s224 = sphi 0, %s226
      %s227 = sphi 0, %s224
      %s228 = sphi 0, %s227
      %s244 = sphi 0, %s228
    $region4: #{quantized_very_net.1} parent=1 // loop_header_branch
      %23 = sbr.rel (%p21) target = $region8
    $region5: #{quantized_very_net.1} parent=1 // loop_body
      %s25 = ssub.s32 %s20, 1
      %s26 = ssub.s32 %s20, 2
      %s27 = sadd.s32 %s20, 1
      %s28 = ssub.s32 %s20, %s27
      %p29 = scmp.eq.s32.totalorder %s28, 0
      %s31 = sadd.s32 %s30, 1
      %s32 = scalar_select %p29, %s30, %s31
      %p35 = pneg %p29
      %p36 = scmp.eq.s32.totalorder %s20, 1
      %p37 = por %p35, %p36
      %p38 = scmp.ne.s32.totalorder %s30, %s33
      %p39 = scmp.eq.s32.totalorder %s20, 0
      %p40 = por %p38, %p39
      %p41 = scmp.ne.s32.totalorder %s30, %s33
      %p42 = scmp.eq.s32.totalorder %s25, 1
      %p43 = por %p41, %p42
      %p44 = scmp.ne.s32.totalorder %s33, %s34
      %p45 = scmp.eq.s32.totalorder %s25, 0
      %p46 = por %p44, %p45
      %p47 = scmp.ne.s32.totalorder %s33, %s34
      %p48 = scmp.eq.s32.totalorder %s26, 1
      %p49 = por %p47, %p48
      %p51 = scmp.ne.s32.totalorder %s34, %s50
      %p52 = scmp.eq.s32.totalorder %s26, 0
      %p53 = por %p51, %p52
      %s55 = sadd.s32 %s54, 1
      %p58 = scmp.eq.s32.totalorder %s20, 1
      %p59 = scmp.ne.s32.totalorder %s54, %s56
      %p60 = scmp.eq.s32.totalorder %s20, 0
      %p61 = por %p59, %p60
      %p62 = scmp.ne.s32.totalorder %s54, %s56
      %p63 = scmp.eq.s32.totalorder %s25, 1
      %p64 = por %p62, %p63
      %p65 = scmp.ne.s32.totalorder %s56, %s57
      %p66 = scmp.eq.s32.totalorder %s25, 0
      %p67 = por %p65, %p66
      %p68 = scmp.ne.s32.totalorder %s56, %s57
      %p69 = scmp.eq.s32.totalorder %s26, 1
      %p70 = por %p68, %p69
      %p72 = scmp.ne.s32.totalorder %s57, %s71
      %p73 = scmp.eq.s32.totalorder %s26, 0
      %p74 = por %p72, %p73
      %s76 = sadd.s32 %s75, 1
      %p79 = scmp.eq.s32.totalorder %s20, 1
      %p80 = scmp.ne.s32.totalorder %s75, %s77
      %p81 = scmp.eq.s32.totalorder %s20, 0
      %p82 = por %p80, %p81
      %p83 = scmp.ne.s32.totalorder %s75, %s77
      %p84 = scmp.eq.s32.totalorder %s25, 1
      %p85 = por %p83, %p84
      %p86 = scmp.ne.s32.totalorder %s77, %s78
      %p87 = scmp.eq.s32.totalorder %s25, 0
      %p88 = por %p86, %p87
      %p89 = scmp.ne.s32.totalorder %s77, %s78
      %p90 = scmp.eq.s32.totalorder %s26, 1
      %p91 = por %p89, %p90
      %p93 = scmp.ne.s32.totalorder %s78, %s92
      %p94 = scmp.eq.s32.totalorder %s26, 0
      %p95 = por %p93, %p94
      %s97 = sadd.s32 %s96, 1
      %p100 = scmp.eq.s32.totalorder %s20, 1
      %p101 = scmp.ne.s32.totalorder %s96, %s98
      %p102 = scmp.eq.s32.totalorder %s20, 0
      %p103 = por %p101, %p102
      %p104 = scmp.ne.s32.totalorder %s96, %s98
      %p105 = scmp.eq.s32.totalorder %s25, 1
      %p106 = por %p104, %p105
      %p107 = scmp.ne.s32.totalorder %s98, %s99
      %p108 = scmp.eq.s32.totalorder %s25, 0
      %p109 = por %p107, %p108
      %p110 = scmp.ne.s32.totalorder %s98, %s99
      %p111 = scmp.eq.s32.totalorder %s26, 1
      %p112 = por %p110, %p111
      %p114 = scmp.ne.s32.totalorder %s99, %s113
      %p115 = scmp.eq.s32.totalorder %s26, 0
      %p116 = por %p114, %p115
      %s118 = sadd.s32 %s117, 1
      %p121 = scmp.eq.s32.totalorder %s20, 1
      %p122 = scmp.ne.s32.totalorder %s117, %s119
      %p123 = scmp.eq.s32.totalorder %s20, 0
      %p124 = por %p122, %p123
      %p125 = scmp.ne.s32.totalorder %s117, %s119
      %p126 = scmp.eq.s32.totalorder %s25, 1
      %p127 = por %p125, %p126
      %p128 = scmp.ne.s32.totalorder %s119, %s120
      %p129 = scmp.eq.s32.totalorder %s25, 0
      %p130 = por %p128, %p129
      %p131 = scmp.ne.s32.totalorder %s119, %s120
      %p132 = scmp.eq.s32.totalorder %s26, 1
      %p133 = por %p131, %p132
      %p135 = scmp.ne.s32.totalorder %s120, %s134
      %p136 = scmp.eq.s32.totalorder %s26, 0
      %p137 = por %p135, %p136
      %s139 = sadd.s32 %s138, 1
      %p142 = scmp.eq.s32.totalorder %s20, 1
      %p143 = scmp.ne.s32.totalorder %s138, %s140
      %p144 = scmp.eq.s32.totalorder %s20, 0
      %p145 = por %p143, %p144
      %p146 = scmp.ne.s32.totalorder %s138, %s140
      %p147 = scmp.eq.s32.totalorder %s25, 1
      %p148 = por %p146, %p147
      %p149 = scmp.ne.s32.totalorder %s140, %s141
      %p150 = scmp.eq.s32.totalorder %s25, 0
      %p151 = por %p149, %p150
      %p152 = scmp.ne.s32.totalorder %s140, %s141
      %p153 = scmp.eq.s32.totalorder %s26, 1
      %p154 = por %p152, %p153
      %p156 = scmp.ne.s32.totalorder %s141, %s155
      %p157 = scmp.eq.s32.totalorder %s26, 0
      %p158 = por %p156, %p157
      %s160 = sadd.s32 %s159, 1
      %p163 = scmp.eq.s32.totalorder %s20, 1
      %p164 = scmp.ne.s32.totalorder %s159, %s161
      %p165 = scmp.eq.s32.totalorder %s20, 0
      %p166 = por %p164, %p165
      %p167 = scmp.ne.s32.totalorder %s159, %s161
      %p168 = scmp.eq.s32.totalorder %s25, 1
      %p169 = por %p167, %p168
      %p170 = scmp.ne.s32.totalorder %s161, %s162
      %p171 = scmp.eq.s32.totalorder %s25, 0
      %p172 = por %p170, %p171
      %p173 = scmp.ne.s32.totalorder %s161, %s162
      %p174 = scmp.eq.s32.totalorder %s26, 1
      %p175 = por %p173, %p174
      %p177 = scmp.ne.s32.totalorder %s162, %s176
      %p178 = scmp.eq.s32.totalorder %s26, 0
      %p179 = por %p177, %p178
      %s181 = sadd.s32 %s180, 1
      %p184 = scmp.eq.s32.totalorder %s20, 1
      %p185 = scmp.ne.s32.totalorder %s180, %s182
      %p186 = scmp.eq.s32.totalorder %s20, 0
      %p187 = por %p185, %p186
      %p188 = scmp.ne.s32.totalorder %s180, %s182
      %p189 = scmp.eq.s32.totalorder %s25, 1
      %p190 = por %p188, %p189
      %p191 = scmp.ne.s32.totalorder %s182, %s183
      %p192 = scmp.eq.s32.totalorder %s25, 0
      %p193 = por %p191, %p192
      %p194 = scmp.ne.s32.totalorder %s182, %s183
      %p195 = scmp.eq.s32.totalorder %s26, 1
      %p196 = por %p194, %p195
      %p198 = scmp.ne.s32.totalorder %s183, %s197
      %p199 = scmp.eq.s32.totalorder %s26, 0
      %p200 = por %p198, %p199
      %s202 = sadd.s32 %s201, 1
      %p205 = scmp.eq.s32.totalorder %s20, 1
      %p206 = scmp.ne.s32.totalorder %s201, %s203
      %p207 = scmp.eq.s32.totalorder %s20, 0
      %p208 = por %p206, %p207
      %p209 = scmp.ne.s32.totalorder %s201, %s203
      %p210 = scmp.eq.s32.totalorder %s25, 1
      %p211 = por %p209, %p210
      %p212 = scmp.ne.s32.totalorder %s203, %s204
      %p213 = scmp.eq.s32.totalorder %s25, 0
      %p214 = por %p212, %p213
      %p215 = scmp.ne.s32.totalorder %s203, %s204
      %p216 = scmp.eq.s32.totalorder %s26, 1
      %p217 = por %p215, %p216
      %p219 = scmp.ne.s32.totalorder %s204, %s218
      %p220 = scmp.eq.s32.totalorder %s26, 0
      %p221 = por %p219, %p220
      %s222 = ssub.s32 %s20, %s27
      %p223 = scmp.eq.s32.totalorder %s222, 0
      %s225 = sadd.s32 %s224, 1
      %s226 = scalar_select %p223, %s224, %s225
      %p229 = pneg %p223
      %p230 = scmp.eq.s32.totalorder %s20, 1
      %p231 = por %p229, %p230
      %p232 = scmp.ne.s32.totalorder %s224, %s227
      %p233 = scmp.eq.s32.totalorder %s20, 0
      %p234 = por %p232, %p233
      %p235 = scmp.ne.s32.totalorder %s224, %s227
      %p236 = scmp.eq.s32.totalorder %s25, 1
      %p237 = por %p235, %p236
      %p238 = scmp.ne.s32.totalorder %s227, %s228
      %p239 = scmp.eq.s32.totalorder %s25, 0
      %p240 = por %p238, %p239
      %p241 = scmp.ne.s32.totalorder %s227, %s228
      %p242 = scmp.eq.s32.totalorder %s26, 1
      %p243 = por %p241, %p242
      %p245 = scmp.ne.s32.totalorder %s228, %s244
      %p246 = scmp.eq.s32.totalorder %s26, 0
      %p247 = por %p245, %p246
      %p248 = scmp.le.s32.totalorder 1, %s20
      %p249 = scmp.lt.s32.totalorder %s20, 3
      %p250 = pnand %p248, %p249
      %p251 = pneg %p250
      // Predicated region
      $region9: #{quantized_very_net.1} parent=5 // pred_check
        _
      $region10: #{quantized_very_net.1} parent=5 // pred_check_branch
        %253 = sbr.rel (%p250) target = $region12
      $region11: #{quantized_very_net.1} parent=5 // pred_region
        %s254 = ssub.s32 %s20, 1
        // Predicated region
        $region13: #{quantized_very_net.1} parent=11 // pred_check
          %p255 = pneg %p67
        $region14: #{quantized_very_net.1} parent=11 // pred_check_branch
          %257 = sbr.rel (%p255) target = $region16
        $region15: #{quantized_very_net.1} parent=11 // pred_region
          %s259 = ssub.s32 6272, 6272
          %260 = vsyncadd [#allocation5], %s259
          %s261 = sshll.u32 [#allocation4], 4
          %s262 = int_to_ptr.vmem [resolvable:$true] %s261
          %267 = dma.hbm_to_vmem [thread:$0]  %s1, 6272, %s262, [#allocation5], 64, 64, 4
        $region16: #{quantized_very_net.1} parent=11 // pred_fallthru
          _
        // Predicated region
        $region17: #{quantized_very_net.1} parent=11 // pred_check
          %p268 = pneg %p88
        $region18: #{quantized_very_net.1} parent=11 // pred_check_branch
          %270 = sbr.rel (%p268) target = $region20
        $region19: #{quantized_very_net.1} parent=11 // pred_region
          _
        $region20: #{quantized_very_net.1} parent=11 // pred_fallthru
          _
        // Predicated region
        $region21: #{quantized_very_net.1} parent=11 // pred_check
          %p271 = pneg %p109
        $region22: #{quantized_very_net.1} parent=11 // pred_check_branch
          %273 = sbr.rel (%p271) target = $region24
        $region23: #{quantized_very_net.1} parent=11 // pred_region
          %s275 = ssub.s32 1024, 1024
          %276 = vsyncadd [#allocation5], %s275
          %s277 = sshll.u32 [#allocation6], 4
          %s278 = int_to_ptr.vmem [resolvable:$true] %s277
          %283 = dma.hbm_to_vmem [thread:$0]  %s3, 1024, %s278, [#allocation5], 64, 64, 4
        $region24: #{quantized_very_net.1} parent=11 // pred_fallthru
          _
        // Predicated region
        $region25: #{quantized_very_net.1} parent=11 // pred_check
          %p284 = pneg %p130
        $region26: #{quantized_very_net.1} parent=11 // pred_check_branch
          %286 = sbr.rel (%p284) target = $region28
        $region27: #{quantized_very_net.1} parent=11 // pred_region
          _
        $region28: #{quantized_very_net.1} parent=11 // pred_fallthru
          _
        // Predicated region
        $region29: #{quantized_very_net.1} parent=11 // pred_check
          %p287 = pneg %p151
        $region30: #{quantized_very_net.1} parent=11 // pred_check_branch
          %289 = sbr.rel (%p287) target = $region32
        $region31: #{quantized_very_net.1} parent=11 // pred_region
          %s291 = ssub.s32 1024, 1024
          %292 = vsyncadd [#allocation8], %s291
          %s293 = sshll.u32 [#allocation7], 4
          %s294 = int_to_ptr.vmem [resolvable:$true] %s293
          %299 = dma.hbm_to_vmem [thread:$0]  %s5, 1024, %s294, [#allocation8], 64, 64, 4
        $region32: #{quantized_very_net.1} parent=11 // pred_fallthru
          _
        // Predicated region
        $region33: #{quantized_very_net.1} parent=11 // pred_check
          %p300 = pneg %p172
        $region34: #{quantized_very_net.1} parent=11 // pred_check_branch
          %302 = sbr.rel (%p300) target = $region36
        $region35: #{quantized_very_net.1} parent=11 // pred_region
          _
        $region36: #{quantized_very_net.1} parent=11 // pred_fallthru
          _
        // Predicated region
        $region37: #{quantized_very_net.1} parent=11 // pred_check
          %p303 = pneg %p193
        $region38: #{quantized_very_net.1} parent=11 // pred_check_branch
          %305 = sbr.rel (%p303) target = $region40
        $region39: #{quantized_very_net.1} parent=11 // pred_region
          %s307 = ssub.s32 1024, 1024
          %308 = vsyncadd [#allocation8], %s307
          %s309 = sshll.u32 [#allocation9], 4
          %s310 = int_to_ptr.vmem [resolvable:$true] %s309
          %315 = dma.hbm_to_vmem [thread:$0]  %s7, 1024, %s310, [#allocation8], 64, 64, 4
        $region40: #{quantized_very_net.1} parent=11 // pred_fallthru
          _
        // Predicated region
        $region41: #{quantized_very_net.1} parent=11 // pred_check
          %p316 = pneg %p214
        $region42: #{quantized_very_net.1} parent=11 // pred_check_branch
          %318 = sbr.rel (%p316) target = $region44
        $region43: #{quantized_very_net.1} parent=11 // pred_region
          _
        $region44: #{quantized_very_net.1} parent=11 // pred_fallthru
          _
      $region12: #{quantized_very_net.1} parent=5 // pred_fallthru
        _
      %p319 = scmp.lt.s32.totalorder %s20, 2
      // Predicated region
      $region45: #{quantized_very_net.1} parent=5 // pred_check
        %p320 = pneg %p319
      $region46: #{quantized_very_net.1} parent=5 // pred_check_branch
        %322 = sbr.rel (%p320) target = $region48
      $region47: #{quantized_very_net.1} parent=5 // pred_region
        // Predicated region
        $region49: #{quantized_very_net.1} parent=47 // pred_check
          %p323 = pneg %p40
        $region50: #{quantized_very_net.1} parent=47 // pred_check_branch
          %325 = sbr.rel (%p323) target = $region52
        $region51: #{quantized_very_net.1} parent=47 // pred_region
          %s326 = sand.u32 %s30, 1
          %s327 = scalar_lea.sflag [#allocation3], %s326
          %s328 = sand.u32 %s30, 1
          %s329 = smul.addr %s328, 560
          %s330 = scalar_lea.vmem [#allocation2], %s329
          %s331 = smul.u32 10, %s20
          %s333 = ssub.s32 8960, 8960
          %334 = vsyncadd %s327, %s333
          %s335 = smul.addr %s331, 7
          %s336 = smul.addr %s335, 128
          %s337 = scalar_lea.hbm %s0, %s336
          %s338 = sshll.u32 %s330, 4
          %s339 = int_to_ptr.vmem [resolvable:$true] %s338
          %344 = dma.hbm_to_vmem [thread:$0]  %s337, 8960, %s339, %s327, 896, 896, 56
        $region52: #{quantized_very_net.1} parent=47 // pred_fallthru
          _
      $region48: #{quantized_very_net.1} parent=5 // pred_fallthru
        _
      %p345 = scmp.le.s32.totalorder 1, %s20
      %p346 = scmp.lt.s32.totalorder %s20, 3
      %p347 = pnand %p345, %p346
      %p348 = pneg %p347
      // Predicated region
      $region53: #{quantized_very_net.1} parent=5 // pred_check
        _
      $region54: #{quantized_very_net.1} parent=5 // pred_check_branch
        %350 = sbr.rel (%p347) target = $region56
      $region55: #{quantized_very_net.1} parent=5 // pred_region
        %s351 = ssub.s32 %s20, 1
        %s352 = sand.u32 %s33, 1
        %s353 = scalar_lea.sflag [#allocation3], %s352
        %s354 = sand.u32 %s33, 1
        %s355 = smul.addr %s354, 560
        %s356 = scalar_lea.vmem [#allocation2], %s355
        // Predicated region
        $region57: #{quantized_very_net.1} parent=55 // pred_check
          %p357 = pneg %p46
        $region58: #{quantized_very_net.1} parent=55 // pred_check_branch
          %359 = sbr.rel (%p357) target = $region60
        $region59: #{quantized_very_net.1} parent=55 // pred_region
          %360 = dma.done %s353, 8960
        $region60: #{quantized_very_net.1} parent=55 // pred_fallthru
          _
        // Predicated region
        $region61: #{quantized_very_net.1} parent=55 // pred_check
          %p361 = pneg %p67
        $region62: #{quantized_very_net.1} parent=55 // pred_check_branch
          %363 = sbr.rel (%p361) target = $region64
        $region63: #{quantized_very_net.1} parent=55 // pred_region
          %364 = dma.done [#allocation5], 6272
        $region64: #{quantized_very_net.1} parent=55 // pred_fallthru
          _
        // Predicated region
        $region65: #{quantized_very_net.1} parent=55 // pred_check
          %p365 = pneg %p109
        $region66: #{quantized_very_net.1} parent=55 // pred_check_branch
          %367 = sbr.rel (%p365) target = $region68
        $region67: #{quantized_very_net.1} parent=55 // pred_region
          %368 = dma.done [#allocation5], 1024
        $region68: #{quantized_very_net.1} parent=55 // pred_fallthru
          _
        // Predicated region
        $region69: #{quantized_very_net.1} parent=55 // pred_check
          %p369 = pneg %p151
        $region70: #{quantized_very_net.1} parent=55 // pred_check_branch
          %371 = sbr.rel (%p369) target = $region72
        $region71: #{quantized_very_net.1} parent=55 // pred_region
          %372 = dma.done [#allocation8], 1024
        $region72: #{quantized_very_net.1} parent=55 // pred_fallthru
          _
        // Predicated region
        $region73: #{quantized_very_net.1} parent=55 // pred_check
          %p373 = pneg %p193
        $region74: #{quantized_very_net.1} parent=55 // pred_check_branch
          %375 = sbr.rel (%p373) target = $region76
        $region75: #{quantized_very_net.1} parent=55 // pred_region
          %376 = dma.done [#allocation8], 1024
        $region76: #{quantized_very_net.1} parent=55 // pred_fallthru
          _
        %s377 = sand.u32 %s33, 1
        %s378 = scalar_lea.sflag [#allocation3], %s377
        %s379 = sand.u32 %s33, 1
        %s380 = smul.addr %s379, 560
        %s381 = scalar_lea.vmem [#allocation2], %s380
        %p382 = pneg %p46
        %p383 = pneg %p43
        %p384 = pneg %p67
        %p385 = pneg %p64
        %p386 = pneg %p88
        %p387 = pneg %p85
        %p388 = pneg %p109
        %p389 = pneg %p106
        %p390 = pneg %p130
        %p391 = pneg %p127
        %p392 = pneg %p151
        %p393 = pneg %p148
        %p394 = pneg %p172
        %p395 = pneg %p169
        %p396 = pneg %p193
        %p397 = pneg %p190
        %p398 = pneg %p214
        %p399 = pneg %p211
        %p400 = pneg %p240
        %p401 = pneg %p237
        %s402 = smul.u32 10, %s25
        %p403 = scmp.lt.s32.totalorder %s402, 19
        %s404 = scalar_select %p403, %s402, 19
        %s405 = smul.addr %s404, 4
        %s406 = scalar_lea.vmem %s9, %s405
        %s407 = smul.u32 10, %s25
        %s408 = smul.u32 10, %s25
        %p409 = scmp.lt.s32.totalorder %s408, 19
        %s410 = scalar_select %p409, %s408, 19
        %s411 = smul.addr %s410, 4
        %s412 = scalar_lea.vmem %s9, %s411
        %s413 = smul.u32 10, %s25
        %v415 = vld [vmem:[%s356] sm:$0xff]
        %v416 = vld [vmem:[%s356 + $0x8] sm:$0xff]
        %v417 = vld [vmem:[%s356 + $0x10] sm:$0xff]
        %v418 = vld [vmem:[%s356 + $0x18] sm:$0xff]
        %v419 = vld [vmem:[%s356 + $0x20] sm:$0xff]
        %v420 = vld [vmem:[%s356 + $0x28] sm:$0xff]
        %v421 = vld [vmem:[%s356 + $0x30] sm:$0xff]
        %v422 = vld [vmem:[%s356 + $0x38] sm:$0xff]
        %v423 = vld [vmem:[%s356 + $0x40] sm:$0xff]
        %v424 = vld [vmem:[%s356 + $0x48] sm:$0xff]
        %v425 = vld [vmem:[%s356 + $0x50] sm:$0xff]
        %v426 = vld [vmem:[%s356 + $0x58] sm:$0xff]
        %v427 = vld [vmem:[%s356 + $0x60] sm:$0xff]
        %v428 = vld [vmem:[%s356 + $0x68] sm:$0xff]
        %v429 = vld [vmem:[%s356 + $0x70] sm:$0xff]
        %v430 = vld [vmem:[%s356 + $0x78] sm:$0xff]
        %v431 = vld [vmem:[%s356 + $0x80] sm:$0xff]
        %v432 = vld [vmem:[%s356 + $0x88] sm:$0xff]
        %v433 = vld [vmem:[%s356 + $0x90] sm:$0xff]
        %v434 = vld [vmem:[%s356 + $0x98] sm:$0xff]
        %v435 = vld [vmem:[%s356 + $0xa0] sm:$0xff]
        %v436 = vld [vmem:[%s356 + $0xa8] sm:$0xff]
        %v437 = vld [vmem:[%s356 + $0xb0] sm:$0xff]
        %v438 = vld [vmem:[%s356 + $0xb8] sm:$0xff]
        %v439 = vld [vmem:[%s356 + $0xc0] sm:$0xff]
        %v440 = vld [vmem:[%s356 + $0xc8] sm:$0xff]
        %v441 = vld [vmem:[%s356 + $0xd0] sm:$0xff]
        %v442 = vld [vmem:[%s356 + $0xd8] sm:$0xff]
        %v443 = vld [vmem:[%s356 + $0xe0] sm:$0xff]
        %v444 = vld [vmem:[%s356 + $0xe8] sm:$0xff]
        %v445 = vld [vmem:[%s356 + $0xf0] sm:$0xff]
        %v446 = vld [vmem:[%s356 + $0xf8] sm:$0xff]
        %v447 = vld [vmem:[%s356 + $0x100] sm:$0xff]
        %v448 = vld [vmem:[%s356 + $0x108] sm:$0xff]
        %v449 = vld [vmem:[%s356 + $0x110] sm:$0xff]
        %v450 = vld [vmem:[%s356 + $0x118] sm:$0xff]
        %v451 = vld [vmem:[%s356 + $0x120] sm:$0xff]
        %v452 = vld [vmem:[%s356 + $0x128] sm:$0xff]
        %v453 = vld [vmem:[%s356 + $0x130] sm:$0xff]
        %v454 = vld [vmem:[%s356 + $0x138] sm:$0xff]
        %v455 = vld [vmem:[%s356 + $0x140] sm:$0xff]
        %v456 = vld [vmem:[%s356 + $0x148] sm:$0xff]
        %v457 = vld [vmem:[%s356 + $0x150] sm:$0xff]
        %v458 = vld [vmem:[%s356 + $0x158] sm:$0xff]
        %v459 = vld [vmem:[%s356 + $0x160] sm:$0xff]
        %v460 = vld [vmem:[%s356 + $0x168] sm:$0xff]
        %v461 = vld [vmem:[%s356 + $0x170] sm:$0xff]
        %v462 = vld [vmem:[%s356 + $0x178] sm:$0xff]
        %v463 = vld [vmem:[%s356 + $0x180] sm:$0xff]
        %v464 = vld [vmem:[%s356 + $0x188] sm:$0xff]
        %v465 = vld [vmem:[%s356 + $0x190] sm:$0xff]
        %v466 = vld [vmem:[%s356 + $0x198] sm:$0xff]
        %v467 = vld [vmem:[%s356 + $0x1a0] sm:$0xff]
        %v468 = vld [vmem:[%s356 + $0x1a8] sm:$0xff]
        %v469 = vld [vmem:[%s356 + $0x1b0] sm:$0xff]
        %v470 = vld [vmem:[%s356 + $0x1b8] sm:$0xff]
        %v471 = vld [vmem:[%s356 + $0x1c0] sm:$0xff]
        %v472 = vld [vmem:[%s356 + $0x1c8] sm:$0xff]
        %v473 = vld [vmem:[%s356 + $0x1d0] sm:$0xff]
        %v474 = vld [vmem:[%s356 + $0x1d8] sm:$0xff]
        %v475 = vld [vmem:[%s356 + $0x1e0] sm:$0xff]
        %v476 = vld [vmem:[%s356 + $0x1e8] sm:$0xff]
        %v477 = vld [vmem:[%s356 + $0x1f0] sm:$0xff]
        %v478 = vld [vmem:[%s356 + $0x1f8] sm:$0xff]
        %v479 = vld [vmem:[%s356 + $0x200] sm:$0xff]
        %v480 = vld [vmem:[%s356 + $0x208] sm:$0xff]
        %v481 = vld [vmem:[%s356 + $0x210] sm:$0xff]
        %v482 = vld [vmem:[%s356 + $0x218] sm:$0xff]
        %v483 = vld [vmem:[%s356 + $0x220] sm:$0xff]
        %v484 = vld [vmem:[%s356 + $0x228] sm:$0xff]
        %v485 = vpack.c.bf16 %v422, %v415
        %v486 = vpack.c.bf16 %v423, %v416
        %v487 = vpack.c.bf16 %v424, %v417
        %v488 = vpack.c.bf16 %v425, %v418
        %v489 = vpack.c.bf16 %v426, %v419
        %v490 = vpack.c.bf16 %v427, %v420
        %v491 = vpack.c.bf16 %v428, %v421
        %v492 = vpack.c.bf16 %v436, %v429
        %v493 = vpack.c.bf16 %v437, %v430
        %v494 = vpack.c.bf16 %v438, %v431
        %v495 = vpack.c.bf16 %v439, %v432
        %v496 = vpack.c.bf16 %v440, %v433
        %v497 = vpack.c.bf16 %v441, %v434
        %v498 = vpack.c.bf16 %v442, %v435
        %v499 = vpack.c.bf16 %v450, %v443
        %v500 = vpack.c.bf16 %v451, %v444
        %v501 = vpack.c.bf16 %v452, %v445
        %v502 = vpack.c.bf16 %v453, %v446
        %v503 = vpack.c.bf16 %v454, %v447
        %v504 = vpack.c.bf16 %v455, %v448
        %v505 = vpack.c.bf16 %v456, %v449
        %v506 = vpack.c.bf16 %v464, %v457
        %v507 = vpack.c.bf16 %v465, %v458
        %v508 = vpack.c.bf16 %v466, %v459
        %v509 = vpack.c.bf16 %v467, %v460
        %v510 = vpack.c.bf16 %v468, %v461
        %v511 = vpack.c.bf16 %v469, %v462
        %v512 = vpack.c.bf16 %v470, %v463
        %v513 = vpack.c.bf16 %v478, %v471
        %v514 = vpack.c.bf16 %v479, %v472
        %v515 = vpack.c.bf16 %v480, %v473
        %v516 = vpack.c.bf16 %v481, %v474
        %v517 = vpack.c.bf16 %v482, %v475
        %v518 = vpack.c.bf16 %v483, %v476
        %v519 = vpack.c.bf16 %v484, %v477
        %v520 = vld [vmem:[#allocation4] sm:$0xf]
        %v521 = vld [vmem:[#allocation4 + $0x4] sm:$0xf]
        %v522 = vld [vmem:[#allocation4 + $0x8] sm:$0xf]
        %v523 = vld [vmem:[#allocation4 + $0xc] sm:$0xf]
        %v524 = vld [vmem:[#allocation4 + $0x10] sm:$0xf]
        %v525 = vld [vmem:[#allocation4 + $0x14] sm:$0xf]
        %v526 = vld [vmem:[#allocation4 + $0x18] sm:$0xf]
        %v527 = vld [vmem:[#allocation4 + $0x1c] sm:$0xf]
        %v528 = vld [vmem:[#allocation4 + $0x20] sm:$0xf]
        %v529 = vld [vmem:[#allocation4 + $0x24] sm:$0xf]
        %v530 = vld [vmem:[#allocation4 + $0x28] sm:$0xf]
        %v531 = vld [vmem:[#allocation4 + $0x2c] sm:$0xf]
        %v532 = vld [vmem:[#allocation4 + $0x30] sm:$0xf]
        %v533 = vld [vmem:[#allocation4 + $0x34] sm:$0xf]
        %v534 = vld [vmem:[#allocation4 + $0x38] sm:$0xf]
        %v535 = vld [vmem:[#allocation4 + $0x3c] sm:$0xf]
        %v536 = vld [vmem:[#allocation4 + $0x40] sm:$0xf]
        %v537 = vld [vmem:[#allocation4 + $0x44] sm:$0xf]
        %v538 = vld [vmem:[#allocation4 + $0x48] sm:$0xf]
        %v539 = vld [vmem:[#allocation4 + $0x4c] sm:$0xf]
        %v540 = vld [vmem:[#allocation4 + $0x50] sm:$0xf]
        %v541 = vld [vmem:[#allocation4 + $0x54] sm:$0xf]
        %v542 = vld [vmem:[#allocation4 + $0x58] sm:$0xf]
        %v543 = vld [vmem:[#allocation4 + $0x5c] sm:$0xf]
        %v544 = vld [vmem:[#allocation4 + $0x60] sm:$0xf]
        %v545 = vld [vmem:[#allocation4 + $0x64] sm:$0xf]
        %v546 = vld [vmem:[#allocation4 + $0x68] sm:$0xf]
        %v547 = vld [vmem:[#allocation4 + $0x6c] sm:$0xf]
        %v548 = vld [vmem:[#allocation4 + $0x70] sm:$0xf]
        %v549 = vld [vmem:[#allocation4 + $0x74] sm:$0xf]
        %v550 = vld [vmem:[#allocation4 + $0x78] sm:$0xf]
        %v551 = vld [vmem:[#allocation4 + $0x7c] sm:$0xf]
        %v552 = vld [vmem:[#allocation4 + $0x80] sm:$0xf]
        %v553 = vld [vmem:[#allocation4 + $0x84] sm:$0xf]
        %v554 = vld [vmem:[#allocation4 + $0x88] sm:$0xf]
        %v555 = vld [vmem:[#allocation4 + $0x8c] sm:$0xf]
        %v556 = vld [vmem:[#allocation4 + $0x90] sm:$0xf]
        %v557 = vld [vmem:[#allocation4 + $0x94] sm:$0xf]
        %v558 = vld [vmem:[#allocation4 + $0x98] sm:$0xf]
        %v559 = vld [vmem:[#allocation4 + $0x9c] sm:$0xf]
        %v560 = vld [vmem:[#allocation4 + $0xa0] sm:$0xf]
        %v561 = vld [vmem:[#allocation4 + $0xa4] sm:$0xf]
        %v562 = vld [vmem:[#allocation4 + $0xa8] sm:$0xf]
        %v563 = vld [vmem:[#allocation4 + $0xac] sm:$0xf]
        %v564 = vld [vmem:[#allocation4 + $0xb0] sm:$0xf]
        %v565 = vld [vmem:[#allocation4 + $0xb4] sm:$0xf]
        %v566 = vld [vmem:[#allocation4 + $0xb8] sm:$0xf]
        %v567 = vld [vmem:[#allocation4 + $0xbc] sm:$0xf]
        %v568 = vld [vmem:[#allocation4 + $0xc0] sm:$0xf]
        %v569 = vld [vmem:[#allocation4 + $0xc4] sm:$0xf]
        %v570 = vld [vmem:[#allocation4 + $0xc8] sm:$0xf]
        %v571 = vld [vmem:[#allocation4 + $0xcc] sm:$0xf]
        %v572 = vld [vmem:[#allocation4 + $0xd0] sm:$0xf]
        %v573 = vld [vmem:[#allocation4 + $0xd4] sm:$0xf]
        %v574 = vld [vmem:[#allocation4 + $0xd8] sm:$0xf]
        %v575 = vld [vmem:[#allocation4 + $0xdc] sm:$0xf]
        %v576 = vld [vmem:[#allocation4 + $0xe0] sm:$0xf]
        %v577 = vld [vmem:[#allocation4 + $0xe4] sm:$0xf]
        %v578 = vld [vmem:[#allocation4 + $0xe8] sm:$0xf]
        %v579 = vld [vmem:[#allocation4 + $0xec] sm:$0xf]
        %v580 = vld [vmem:[#allocation4 + $0xf0] sm:$0xf]
        %v581 = vld [vmem:[#allocation4 + $0xf4] sm:$0xf]
        %v582 = vld [vmem:[#allocation4 + $0xf8] sm:$0xf]
        %v583 = vld [vmem:[#allocation4 + $0xfc] sm:$0xf]
        %v584 = vld [vmem:[#allocation4 + $0x100] sm:$0xf]
        %v585 = vld [vmem:[#allocation4 + $0x104] sm:$0xf]
        %v586 = vld [vmem:[#allocation4 + $0x108] sm:$0xf]
        %v587 = vld [vmem:[#allocation4 + $0x10c] sm:$0xf]
        %v588 = vld [vmem:[#allocation4 + $0x110] sm:$0xf]
        %v589 = vld [vmem:[#allocation4 + $0x114] sm:$0xf]
        %v590 = vld [vmem:[#allocation4 + $0x118] sm:$0xf]
        %v591 = vld [vmem:[#allocation4 + $0x11c] sm:$0xf]
        %v592 = vld [vmem:[#allocation4 + $0x120] sm:$0xf]
        %v593 = vld [vmem:[#allocation4 + $0x124] sm:$0xf]
        %v594 = vld [vmem:[#allocation4 + $0x128] sm:$0xf]
        %v595 = vld [vmem:[#allocation4 + $0x12c] sm:$0xf]
        %v596 = vld [vmem:[#allocation4 + $0x130] sm:$0xf]
        %v597 = vld [vmem:[#allocation4 + $0x134] sm:$0xf]
        %v598 = vld [vmem:[#allocation4 + $0x138] sm:$0xf]
        %v599 = vld [vmem:[#allocation4 + $0x13c] sm:$0xf]
        %v600 = vld [vmem:[#allocation4 + $0x140] sm:$0xf]
        %v601 = vld [vmem:[#allocation4 + $0x144] sm:$0xf]
        %v602 = vld [vmem:[#allocation4 + $0x148] sm:$0xf]
        %v603 = vld [vmem:[#allocation4 + $0x14c] sm:$0xf]
        %v604 = vld [vmem:[#allocation4 + $0x150] sm:$0xf]
        %v605 = vld [vmem:[#allocation4 + $0x154] sm:$0xf]
        %v606 = vld [vmem:[#allocation4 + $0x158] sm:$0xf]
        %v607 = vld [vmem:[#allocation4 + $0x15c] sm:$0xf]
        %v608 = vld [vmem:[#allocation4 + $0x160] sm:$0xf]
        %v609 = vld [vmem:[#allocation4 + $0x164] sm:$0xf]
        %v610 = vld [vmem:[#allocation4 + $0x168] sm:$0xf]
        %v611 = vld [vmem:[#allocation4 + $0x16c] sm:$0xf]
        %v612 = vld [vmem:[#allocation4 + $0x170] sm:$0xf]
        %v613 = vld [vmem:[#allocation4 + $0x174] sm:$0xf]
        %v614 = vld [vmem:[#allocation4 + $0x178] sm:$0xf]
        %v615 = vld [vmem:[#allocation4 + $0x17c] sm:$0xf]
        %v616 = vld [vmem:[#allocation4 + $0x180] sm:$0xf]
        %v617 = vld [vmem:[#allocation4 + $0x184] sm:$0xf]
        %v618 = vld [vmem:[%s2] sm:$0x1]
        %v620 = vlaneseq
        %v621 = vshrl.u32 %v620, 7
        %v622 = vsub.s32 0, %v621
        %v623 = vrot.slane %v618, %v622
        %v723 = vunpack.c.l.b16 %v520
        %v724 = vunpack.c.l.b16 %v521
        %v725 = vunpack.c.l.b16 %v522
        %v726 = vunpack.c.l.b16 %v523
        %v727 = vunpack.c.l.b16 %v524
        %v728 = vunpack.c.l.b16 %v525
        %v729 = vunpack.c.l.b16 %v526
        %v730 = vunpack.c.l.b16 %v527
        %v731 = vunpack.c.l.b16 %v528
        %v732 = vunpack.c.l.b16 %v529
        %v733 = vunpack.c.l.b16 %v530
        %v734 = vunpack.c.l.b16 %v531
        %v735 = vunpack.c.l.b16 %v532
        %v736 = vunpack.c.l.b16 %v533
        %v737 = vunpack.c.l.b16 %v534
        %v738 = vunpack.c.l.b16 %v535
        %v739 = vunpack.c.l.b16 %v536
        %v740 = vunpack.c.l.b16 %v537
        %v741 = vunpack.c.l.b16 %v538
        %v742 = vunpack.c.l.b16 %v539
        %v743 = vunpack.c.l.b16 %v540
        %v744 = vunpack.c.l.b16 %v541
        %v745 = vunpack.c.l.b16 %v542
        %v746 = vunpack.c.l.b16 %v543
        %v747 = vunpack.c.l.b16 %v544
        %v748 = vunpack.c.l.b16 %v545
        %v749 = vunpack.c.l.b16 %v546
        %v750 = vunpack.c.l.b16 %v547
        %v751 = vunpack.c.l.b16 %v548
        %v752 = vunpack.c.l.b16 %v549
        %v753 = vunpack.c.l.b16 %v550
        %v754 = vunpack.c.l.b16 %v551
        %v755 = vunpack.c.l.b16 %v552
        %v756 = vunpack.c.l.b16 %v553
        %v757 = vunpack.c.l.b16 %v554
        %v758 = vunpack.c.l.b16 %v555
        %v759 = vunpack.c.l.b16 %v556
        %v760 = vunpack.c.l.b16 %v557
        %v761 = vunpack.c.l.b16 %v558
        %v762 = vunpack.c.l.b16 %v559
        %v763 = vunpack.c.l.b16 %v560
        %v764 = vunpack.c.l.b16 %v561
        %v765 = vunpack.c.l.b16 %v562
        %v766 = vunpack.c.l.b16 %v563
        %v767 = vunpack.c.l.b16 %v564
        %v768 = vunpack.c.l.b16 %v565
        %v769 = vunpack.c.l.b16 %v566
        %v770 = vunpack.c.l.b16 %v567
        %v771 = vunpack.c.l.b16 %v568
        %v772 = vunpack.c.l.b16 %v569
        %v773 = vunpack.c.l.b16 %v570
        %v774 = vunpack.c.l.b16 %v571
        %v775 = vunpack.c.l.b16 %v572
        %v776 = vunpack.c.l.b16 %v573
        %v777 = vunpack.c.l.b16 %v574
        %v778 = vunpack.c.l.b16 %v575
        %v779 = vunpack.c.l.b16 %v576
        %v780 = vunpack.c.l.b16 %v577
        %v781 = vunpack.c.l.b16 %v578
        %v782 = vunpack.c.l.b16 %v579
        %v783 = vunpack.c.l.b16 %v580
        %v784 = vunpack.c.l.b16 %v581
        %v785 = vunpack.c.l.b16 %v582
        %v786 = vunpack.c.l.b16 %v583
        %v787 = vunpack.c.l.b16 %v584
        %v788 = vunpack.c.l.b16 %v585
        %v789 = vunpack.c.l.b16 %v586
        %v790 = vunpack.c.l.b16 %v587
        %v791 = vunpack.c.l.b16 %v588
        %v792 = vunpack.c.l.b16 %v589
        %v793 = vunpack.c.l.b16 %v590
        %v794 = vunpack.c.l.b16 %v591
        %v795 = vunpack.c.l.b16 %v592
        %v796 = vunpack.c.l.b16 %v593
        %v797 = vunpack.c.l.b16 %v594
        %v798 = vunpack.c.l.b16 %v595
        %v799 = vunpack.c.l.b16 %v596
        %v800 = vunpack.c.l.b16 %v597
        %v801 = vunpack.c.l.b16 %v598
        %v802 = vunpack.c.l.b16 %v599
        %v803 = vunpack.c.l.b16 %v600
        %v804 = vunpack.c.l.b16 %v601
        %v805 = vunpack.c.l.b16 %v602
        %v806 = vunpack.c.l.b16 %v603
        %v807 = vunpack.c.l.b16 %v604
        %v808 = vunpack.c.l.b16 %v605
        %v809 = vunpack.c.l.b16 %v606
        %v810 = vunpack.c.l.b16 %v607
        %v811 = vunpack.c.l.b16 %v608
        %v812 = vunpack.c.l.b16 %v609
        %v813 = vunpack.c.l.b16 %v610
        %v814 = vunpack.c.l.b16 %v611
        %v815 = vunpack.c.l.b16 %v612
        %v816 = vunpack.c.l.b16 %v613
        %v817 = vunpack.c.l.b16 %v614
        %v818 = vunpack.c.l.b16 %v615
        %v819 = vunpack.c.l.b16 %v616
        %v820 = vunpack.c.l.b16 %v617
        %v821 = vpack.c.b16 %v724, %v723
        %v822 = vpack.c.b16 %v726, %v725
        %v823 = vpack.c.b16 %v728, %v727
        %v824 = vpack.c.b16 %v730, %v729
        %v825 = vpack.c.b16 %v732, %v731
        %v826 = vpack.c.b16 %v734, %v733
        %v827 = vpack.c.b16 %v736, %v735
        %v828 = vpack.c.b16 %v738, %v737
        %v829 = vpack.c.b16 %v740, %v739
        %v830 = vpack.c.b16 %v742, %v741
        %v831 = vpack.c.b16 %v744, %v743
        %v832 = vpack.c.b16 %v746, %v745
        %v833 = vpack.c.b16 %v748, %v747
        %v834 = vpack.c.b16 %v750, %v749
        %v835 = vpack.c.b16 %v752, %v751
        %v836 = vpack.c.b16 %v754, %v753
        %v837 = vpack.c.b16 %v756, %v755
        %v838 = vpack.c.b16 %v758, %v757
        %v839 = vpack.c.b16 %v760, %v759
        %v840 = vpack.c.b16 %v762, %v761
        %v841 = vpack.c.b16 %v764, %v763
        %v842 = vpack.c.b16 %v766, %v765
        %v843 = vpack.c.b16 %v768, %v767
        %v844 = vpack.c.b16 %v770, %v769
        %v845 = vpack.c.b16 %v772, %v771
        %v846 = vpack.c.b16 %v774, %v773
        %v847 = vpack.c.b16 %v776, %v775
        %v848 = vpack.c.b16 %v778, %v777
        %v849 = vpack.c.b16 %v780, %v779
        %v850 = vpack.c.b16 %v782, %v781
        %v851 = vpack.c.b16 %v784, %v783
        %v852 = vpack.c.b16 %v786, %v785
        %v853 = vpack.c.b16 %v788, %v787
        %v854 = vpack.c.b16 %v790, %v789
        %v855 = vpack.c.b16 %v792, %v791
        %v856 = vpack.c.b16 %v794, %v793
        %v857 = vpack.c.b16 %v796, %v795
        %v858 = vpack.c.b16 %v798, %v797
        %v859 = vpack.c.b16 %v800, %v799
        %v860 = vpack.c.b16 %v802, %v801
        %v861 = vpack.c.b16 %v804, %v803
        %v862 = vpack.c.b16 %v806, %v805
        %v863 = vpack.c.b16 %v808, %v807
        %v864 = vpack.c.b16 %v810, %v809
        %v865 = vpack.c.b16 %v812, %v811
        %v866 = vpack.c.b16 %v814, %v813
        %v867 = vpack.c.b16 %v816, %v815
        %v868 = vpack.c.b16 %v818, %v817
        %v869 = vpack.c.b16 %v820, %v819
        %vm919 = vcmask 130048
        %v921 = vsel %vm919, %v491, 0
        %v924 = vsel %vm919, %v498, 0
        %v927 = vsel %vm919, %v505, 0
        %v930 = vsel %vm919, %v512, 0
        %v933 = vsel %vm919, %v519, 0
        %935 = vmatprep.subr.bf16.mxu0 0
        %936 = vmatpush1.bf16.msra.mxu0 %v821
        %937 = vmatprep.subr.bf16.mxu0 0
        %938 = vmatpush1.bf16.msra.mxu0 %v822
        %939 = vmatprep.subr.bf16.mxu0 0
        %940 = vmatpush1.bf16.msra.mxu0 %v823
        %941 = vmatprep.subr.bf16.mxu0 0
        %942 = vmatpush1.bf16.msra.mxu0 %v824
        %943 = vmatprep.subr.bf16.mxu0 0
        %944 = vmatpush1.bf16.msra.mxu0 %v825
        %945 = vmatprep.subr.bf16.mxu0 0
        %946 = vmatpush1.bf16.msra.mxu0 %v826
        %947 = vmatprep.subr.bf16.mxu0 0
        %948 = vmatpush1.bf16.msra.mxu0 %v827
        %949 = vmatprep.subr.bf16.mxu0 0
        %950 = vmatpush1.bf16.msra.mxu0 %v828
        %951 = vmatprep.subr.bf16.mxu0 0
        %952 = vmatpush1.bf16.msra.mxu0 %v829
        %953 = vmatprep.subr.bf16.mxu0 0
        %954 = vmatpush1.bf16.msra.mxu0 %v830
        %955 = vmatprep.subr.bf16.mxu0 0
        %956 = vmatpush1.bf16.msra.mxu0 %v831
        %957 = vmatprep.subr.bf16.mxu0 0
        %958 = vmatpush1.bf16.msra.mxu0 %v832
        %959 = vmatprep.subr.bf16.mxu0 0
        %960 = vmatpush1.bf16.msra.mxu0 %v833
        %961 = vmatprep.subr.bf16.mxu0 0
        %962 = vmatpush1.bf16.msra.mxu0 %v834
        %963 = vmatprep.subr.bf16.mxu0 0
        %964 = vmatpush1.bf16.msra.mxu0 %v835
        %965 = vmatprep.subr.bf16.mxu0 0
        %966 = vmatpush1.bf16.msra.mxu0 %v836
        %967 = vmatprep.mubr.bf16.mxu0 %v486
        %968 = vmatmul.mubr.bf16.gmra.mrb[0].mxu0 %v485
        %v969 = vpop.f32.mrb[0].mxu0
        %v970 = vadd.f32 %v623, %v969
        %v971 = vpop.f32.mrb[0].mxu0
        %v972 = vpop.f32.mrb[0].mxu0
        %v973 = vadd.f32 %v623, %v972
        %v974 = vpop.f32.mrb[0].mxu0
        %975 = vmatprep.mubr.bf16.mxu0 %v493
        %976 = vmatmul.mubr.bf16.gmra.mrb[0].mxu0 %v492
        %v977 = vpop.f32.mrb[0].mxu0
        %v978 = vadd.f32 %v623, %v977
        %v979 = vpop.f32.mrb[0].mxu0
        %v980 = vpop.f32.mrb[0].mxu0
        %v981 = vadd.f32 %v623, %v980
        %v982 = vpop.f32.mrb[0].mxu0
        %983 = vmatprep.mubr.bf16.mxu0 %v500
        %984 = vmatmul.mubr.bf16.gmra.mrb[0].mxu0 %v499
        %v985 = vpop.f32.mrb[0].mxu0
        %v986 = vadd.f32 %v623, %v985
        %v987 = vpop.f32.mrb[0].mxu0
        %v988 = vpop.f32.mrb[0].mxu0
        %v989 = vadd.f32 %v623, %v988
        %v990 = vpop.f32.mrb[0].mxu0
        %991 = vmatprep.mubr.bf16.mxu0 %v507
        %992 = vmatmul.mubr.bf16.gmra.mrb[0].mxu0 %v506
        %v993 = vpop.f32.mrb[0].mxu0
        %v994 = vadd.f32 %v623, %v993
        %v995 = vpop.f32.mrb[0].mxu0
        %v996 = vpop.f32.mrb[0].mxu0
        %v997 = vadd.f32 %v623, %v996
        %v998 = vpop.f32.mrb[0].mxu0
        %999 = vmatprep.mubr.bf16.mxu0 %v514
        %1000 = vmatmul.mubr.bf16.gmra.mrb[0].mxu0 %v513
        %v1001 = vpop.f32.mrb[0].mxu0
        %v1002 = vadd.f32 %v623, %v1001
        %v1003 = vpop.f32.mrb[0].mxu0
        %v1004 = vpop.f32.mrb[0].mxu0
        %v1005 = vadd.f32 %v623, %v1004
        %v1006 = vpop.f32.mrb[0].mxu0
        %1007 = vdwg.mxu0
        %1008 = vmatprep.subr.bf16.mxu0 0
        %1009 = vmatpush1.bf16.msra.mxu0 %v837
        %1010 = vmatprep.subr.bf16.mxu0 0
        %1011 = vmatpush1.bf16.msra.mxu0 %v838
        %1012 = vmatprep.subr.bf16.mxu0 0
        %1013 = vmatpush1.bf16.msra.mxu0 %v839
        %1014 = vmatprep.subr.bf16.mxu0 0
        %1015 = vmatpush1.bf16.msra.mxu0 %v840
        %1016 = vmatprep.subr.bf16.mxu0 0
        %1017 = vmatpush1.bf16.msra.mxu0 %v841
        %1018 = vmatprep.subr.bf16.mxu0 0
        %1019 = vmatpush1.bf16.msra.mxu0 %v842
        %1020 = vmatprep.subr.bf16.mxu0 0
        %1021 = vmatpush1.bf16.msra.mxu0 %v843
        %1022 = vmatprep.subr.bf16.mxu0 0
        %1023 = vmatpush1.bf16.msra.mxu0 %v844
        %1024 = vmatprep.subr.bf16.mxu0 0
        %1025 = vmatpush1.bf16.msra.mxu0 %v845
        %1026 = vmatprep.subr.bf16.mxu0 0
        %1027 = vmatpush1.bf16.msra.mxu0 %v846
        %1028 = vmatprep.subr.bf16.mxu0 0
        %1029 = vmatpush1.bf16.msra.mxu0 %v847
        %1030 = vmatprep.subr.bf16.mxu0 0
        %1031 = vmatpush1.bf16.msra.mxu0 %v848
        %1032 = vmatprep.subr.bf16.mxu0 0
        %1033 = vmatpush1.bf16.msra.mxu0 %v849
        %1034 = vmatprep.subr.bf16.mxu0 0
        %1035 = vmatpush1.bf16.msra.mxu0 %v850
        %1036 = vmatprep.subr.bf16.mxu0 0
        %1037 = vmatpush1.bf16.msra.mxu0 %v851
        %1038 = vmatprep.subr.bf16.mxu0 0
        %1039 = vmatpush1.bf16.msra.mxu0 %v852
        %1040 = vmatprep.mubr.bf16.mxu0 %v488
        %1041 = vmatmul.mubr.bf16.gmra.mrb[0].mxu0 %v487
        %v1042 = vpop.f32.mrb[0].mxu0
        %v1043 = vadd.f32 %v970, %v1042
        %v1044 = vpop.f32.mrb[0].mxu0
        %v1045 = vpop.f32.mrb[0].mxu0
        %v1046 = vadd.f32 %v973, %v1045
        %v1047 = vpop.f32.mrb[0].mxu0
        %1048 = vmatprep.mubr.bf16.mxu0 %v495
        %1049 = vmatmul.mubr.bf16.gmra.mrb[0].mxu0 %v494
        %v1050 = vpop.f32.mrb[0].mxu0
        %v1051 = vadd.f32 %v978, %v1050
        %v1052 = vpop.f32.mrb[0].mxu0
        %v1053 = vpop.f32.mrb[0].mxu0
        %v1054 = vadd.f32 %v981, %v1053
        %v1055 = vpop.f32.mrb[0].mxu0
        %1056 = vmatprep.mubr.bf16.mxu0 %v502
        %1057 = vmatmul.mubr.bf16.gmra.mrb[0].mxu0 %v501
        %v1058 = vpop.f32.mrb[0].mxu0
        %v1059 = vadd.f32 %v986, %v1058
        %v1060 = vpop.f32.mrb[0].mxu0
        %v1061 = vpop.f32.mrb[0].mxu0
        %v1062 = vadd.f32 %v989, %v1061
        %v1063 = vpop.f32.mrb[0].mxu0
        %1064 = vmatprep.mubr.bf16.mxu0 %v509
        %1065 = vmatmul.mubr.bf16.gmra.mrb[0].mxu0 %v508
        %v1066 = vpop.f32.mrb[0].mxu0
        %v1067 = vadd.f32 %v994, %v1066
        %v1068 = vpop.f32.mrb[0].mxu0
        %v1069 = vpop.f32.mrb[0].mxu0
        %v1070 = vadd.f32 %v997, %v1069
        %v1071 = vpop.f32.mrb[0].mxu0
        %1072 = vmatprep.mubr.bf16.mxu0 %v516
        %1073 = vmatmul.mubr.bf16.gmra.mrb[0].mxu0 %v515
        %v1074 = vpop.f32.mrb[0].mxu0
        %v1075 = vadd.f32 %v1002, %v1074
        %v1076 = vpop.f32.mrb[0].mxu0
        %v1077 = vpop.f32.mrb[0].mxu0
        %v1078 = vadd.f32 %v1005, %v1077
        %v1079 = vpop.f32.mrb[0].mxu0
        %1080 = vdwg.mxu0
        %1081 = vmatprep.subr.bf16.mxu0 0
        %1082 = vmatpush1.bf16.msra.mxu0 %v853
        %1083 = vmatprep.subr.bf16.mxu0 0
        %1084 = vmatpush1.bf16.msra.mxu0 %v854
        %1085 = vmatprep.subr.bf16.mxu0 0
        %1086 = vmatpush1.bf16.msra.mxu0 %v855
        %1087 = vmatprep.subr.bf16.mxu0 0
        %1088 = vmatpush1.bf16.msra.mxu0 %v856
        %1089 = vmatprep.subr.bf16.mxu0 0
        %1090 = vmatpush1.bf16.msra.mxu0 %v857
        %1091 = vmatprep.subr.bf16.mxu0 0
        %1092 = vmatpush1.bf16.msra.mxu0 %v858
        %1093 = vmatprep.subr.bf16.mxu0 0
        %1094 = vmatpush1.bf16.msra.mxu0 %v859
        %1095 = vmatprep.subr.bf16.mxu0 0
        %1096 = vmatpush1.bf16.msra.mxu0 %v860
        %1097 = vmatprep.subr.bf16.mxu0 0
        %1098 = vmatpush1.bf16.msra.mxu0 %v861
        %1099 = vmatprep.subr.bf16.mxu0 0
        %1100 = vmatpush1.bf16.msra.mxu0 %v862
        %1101 = vmatprep.subr.bf16.mxu0 0
        %1102 = vmatpush1.bf16.msra.mxu0 %v863
        %1103 = vmatprep.subr.bf16.mxu0 0
        %1104 = vmatpush1.bf16.msra.mxu0 %v864
        %1105 = vmatprep.subr.bf16.mxu0 0
        %1106 = vmatpush1.bf16.msra.mxu0 %v865
        %1107 = vmatprep.subr.bf16.mxu0 0
        %1108 = vmatpush1.bf16.msra.mxu0 %v866
        %1109 = vmatprep.subr.bf16.mxu0 0
        %1110 = vmatpush1.bf16.msra.mxu0 %v867
        %1111 = vmatprep.subr.bf16.mxu0 0
        %1112 = vmatpush1.bf16.msra.mxu0 %v868
        %1113 = vmatprep.mubr.bf16.mxu0 %v490
        %1114 = vmatmul.mubr.bf16.gmra.mrb[0].mxu0 %v489
        %v1115 = vpop.f32.mrb[0].mxu0
        %v1116 = vadd.f32 %v1043, %v1115
        %v1117 = vpop.f32.mrb[0].mxu0
        %v1118 = vpop.f32.mrb[0].mxu0
        %v1119 = vadd.f32 %v1046, %v1118
        %v1120 = vpop.f32.mrb[0].mxu0
        %1121 = vmatprep.mubr.bf16.mxu0 %v497
        %1122 = vmatmul.mubr.bf16.gmra.mrb[0].mxu0 %v496
        %v1123 = vpop.f32.mrb[0].mxu0
        %v1124 = vadd.f32 %v1051, %v1123
        %v1125 = vpop.f32.mrb[0].mxu0
        %v1126 = vpop.f32.mrb[0].mxu0
        %v1127 = vadd.f32 %v1054, %v1126
        %v1128 = vpop.f32.mrb[0].mxu0
        %1129 = vmatprep.mubr.bf16.mxu0 %v504
        %1130 = vmatmul.mubr.bf16.gmra.mrb[0].mxu0 %v503
        %v1131 = vpop.f32.mrb[0].mxu0
        %v1132 = vadd.f32 %v1059, %v1131
        %v1133 = vpop.f32.mrb[0].mxu0
        %v1134 = vpop.f32.mrb[0].mxu0
        %v1135 = vadd.f32 %v1062, %v1134
        %v1136 = vpop.f32.mrb[0].mxu0
        %1137 = vmatprep.mubr.bf16.mxu0 %v511
        %1138 = vmatmul.mubr.bf16.gmra.mrb[0].mxu0 %v510
        %v1139 = vpop.f32.mrb[0].mxu0
        %v1140 = vadd.f32 %v1067, %v1139
        %v1141 = vpop.f32.mrb[0].mxu0
        %v1142 = vpop.f32.mrb[0].mxu0
        %v1143 = vadd.f32 %v1070, %v1142
        %v1144 = vpop.f32.mrb[0].mxu0
        %1145 = vmatprep.mubr.bf16.mxu0 %v518
        %1146 = vmatmul.mubr.bf16.gmra.mrb[0].mxu0 %v517
        %v1147 = vpop.f32.mrb[0].mxu0
        %v1148 = vadd.f32 %v1075, %v1147
        %v1149 = vpop.f32.mrb[0].mxu0
        %v1150 = vpop.f32.mrb[0].mxu0
        %v1151 = vadd.f32 %v1078, %v1150
        %v1152 = vpop.f32.mrb[0].mxu0
        %1153 = vdwg.mxu0
        %1154 = vmatprep.subr.bf16.mxu0 0
        %1155 = vmatpush1.bf16.msra.mxu0 %v869
        %1156 = vmatprep.subr.bf16.mxu0 0
        %1157 = vmatpush1.bf16.msra.mxu0 0
        %1158 = vmatprep.subr.bf16.mxu0 0
        %1159 = vmatpush1.bf16.msra.mxu0 0
        %1160 = vmatprep.subr.bf16.mxu0 0
        %1161 = vmatpush1.bf16.msra.mxu0 0
        %1162 = vmatprep.subr.bf16.mxu0 0
        %1163 = vmatpush1.bf16.msra.mxu0 0
        %1164 = vmatprep.subr.bf16.mxu0 0
        %1165 = vmatpush1.bf16.msra.mxu0 0
        %1166 = vmatprep.subr.bf16.mxu0 0
        %1167 = vmatpush1.bf16.msra.mxu0 0
        %1168 = vmatprep.subr.bf16.mxu0 0
        %1169 = vmatpush1.bf16.msra.mxu0 0
        %1170 = vmatprep.subr.bf16.mxu0 0
        %1171 = vmatpush1.bf16.msra.mxu0 0
        %1172 = vmatprep.subr.bf16.mxu0 0
        %1173 = vmatpush1.bf16.msra.mxu0 0
        %1174 = vmatprep.subr.bf16.mxu0 0
        %1175 = vmatpush1.bf16.msra.mxu0 0
        %1176 = vmatprep.subr.bf16.mxu0 0
        %1177 = vmatpush1.bf16.msra.mxu0 0
        %1178 = vmatprep.subr.bf16.mxu0 0
        %1179 = vmatpush1.bf16.msra.mxu0 0
        %1180 = vmatprep.subr.bf16.mxu0 0
        %1181 = vmatpush1.bf16.msra.mxu0 0
        %1182 = vmatprep.subr.bf16.mxu0 0
        %1183 = vmatpush1.bf16.msra.mxu0 0
        %1184 = vmatprep.subr.bf16.mxu0 0
        %1185 = vmatpush1.bf16.msra.mxu0 0
        %1186 = vmatprep.mubr.bf16.mxu0 0
        %1187 = vmatmul.mubr.bf16.gmra.mrb[0].mxu0 %v921
        %v1188 = vpop.f32.mrb[0].mxu0
        %v1189 = vadd.f32 %v1116, %v1188
        %v1190 = vpop.f32.mrb[0].mxu0
        %v1191 = vpop.f32.mrb[0].mxu0
        %v1192 = vadd.f32 %v1119, %v1191
        %v1193 = vpop.f32.mrb[0].mxu0
        %1194 = vmatprep.mubr.bf16.mxu0 0
        %1195 = vmatmul.mubr.bf16.gmra.mrb[0].mxu0 %v924
        %v1196 = vpop.f32.mrb[0].mxu0
        %v1197 = vadd.f32 %v1124, %v1196
        %v1198 = vpop.f32.mrb[0].mxu0
        %v1199 = vpop.f32.mrb[0].mxu0
        %v1200 = vadd.f32 %v1127, %v1199
        %v1201 = vpop.f32.mrb[0].mxu0
        %1202 = vmatprep.mubr.bf16.mxu0 0
        %1203 = vmatmul.mubr.bf16.gmra.mrb[0].mxu0 %v927
        %v1204 = vpop.f32.mrb[0].mxu0
        %v1205 = vadd.f32 %v1132, %v1204
        %v1206 = vpop.f32.mrb[0].mxu0
        %v1207 = vpop.f32.mrb[0].mxu0
        %v1208 = vadd.f32 %v1135, %v1207
        %v1209 = vpop.f32.mrb[0].mxu0
        %1210 = vmatprep.mubr.bf16.mxu0 0
        %1211 = vmatmul.mubr.bf16.gmra.mrb[0].mxu0 %v930
        %v1212 = vpop.f32.mrb[0].mxu0
        %v1213 = vadd.f32 %v1140, %v1212
        %v1214 = vpop.f32.mrb[0].mxu0
        %v1215 = vpop.f32.mrb[0].mxu0
        %v1216 = vadd.f32 %v1143, %v1215
        %v1217 = vpop.f32.mrb[0].mxu0
        %1218 = vmatprep.mubr.bf16.mxu0 0
        %1219 = vmatmul.mubr.bf16.gmra.mrb[0].mxu0 %v933
        %v1220 = vpop.f32.mrb[0].mxu0
        %v1221 = vadd.f32 %v1148, %v1220
        %v1222 = vpop.f32.mrb[0].mxu0
        %v1223 = vpop.f32.mrb[0].mxu0
        %v1224 = vadd.f32 %v1151, %v1223
        %v1225 = vpop.f32.mrb[0].mxu0
        %1226 = vdwg.mxu0
        %v1227 = vmax.f32 %v1189, 0.0
        %v1228 = vmax.f32 %v1192, 0.0
        %v1229 = vmax.f32 %v1197, 0.0
        %v1230 = vmax.f32 %v1200, 0.0
        %v1231 = vmax.f32 %v1205, 0.0
        %v1232 = vmax.f32 %v1208, 0.0
        %v1233 = vmax.f32 %v1213, 0.0
        %v1234 = vmax.f32 %v1216, 0.0
        %v1235 = vmax.f32 %v1221, 0.0
        %v1236 = vmax.f32 %v1224, 0.0
        %v1237 = vpack.c.bf16 %v1228, %v1227
        %v1238 = vpack.c.bf16 %v1230, %v1229
        %v1239 = vpack.c.bf16 %v1232, %v1231
        %v1240 = vpack.c.bf16 %v1234, %v1233
        %v1241 = vpack.c.bf16 %v1236, %v1235
        %v1242 = vld [vmem:[#allocation6] sm:$0xf]
        %v1243 = vld [vmem:[#allocation6 + $0x4] sm:$0xf]
        %v1244 = vld [vmem:[#allocation6 + $0x8] sm:$0xf]
        %v1245 = vld [vmem:[#allocation6 + $0xc] sm:$0xf]
        %v1246 = vld [vmem:[#allocation6 + $0x10] sm:$0xf]
        %v1247 = vld [vmem:[#allocation6 + $0x14] sm:$0xf]
        %v1248 = vld [vmem:[#allocation6 + $0x18] sm:$0xf]
        %v1249 = vld [vmem:[#allocation6 + $0x1c] sm:$0xf]
        %v1250 = vld [vmem:[#allocation6 + $0x20] sm:$0xf]
        %v1251 = vld [vmem:[#allocation6 + $0x24] sm:$0xf]
        %v1252 = vld [vmem:[#allocation6 + $0x28] sm:$0xf]
        %v1253 = vld [vmem:[#allocation6 + $0x2c] sm:$0xf]
        %v1254 = vld [vmem:[#allocation6 + $0x30] sm:$0xf]
        %v1255 = vld [vmem:[#allocation6 + $0x34] sm:$0xf]
        %v1256 = vld [vmem:[#allocation6 + $0x38] sm:$0xf]
        %v1257 = vld [vmem:[#allocation6 + $0x3c] sm:$0xf]
        %v1258 = vld [vmem:[%s4] sm:$0x1]
        %v1260 = vlaneseq
        %v1261 = vshrl.u32 %v1260, 7
        %v1262 = vsub.s32 0, %v1261
        %v1263 = vrot.slane %v1258, %v1262
        %v1281 = vunpack.c.l.b16 %v1242
        %v1282 = vunpack.c.l.b16 %v1243
        %v1283 = vunpack.c.l.b16 %v1244
        %v1284 = vunpack.c.l.b16 %v1245
        %v1285 = vunpack.c.l.b16 %v1246
        %v1286 = vunpack.c.l.b16 %v1247
        %v1287 = vunpack.c.l.b16 %v1248
        %v1288 = vunpack.c.l.b16 %v1249
        %v1289 = vunpack.c.l.b16 %v1250
        %v1290 = vunpack.c.l.b16 %v1251
        %v1291 = vunpack.c.l.b16 %v1252
        %v1292 = vunpack.c.l.b16 %v1253
        %v1293 = vunpack.c.l.b16 %v1254
        %v1294 = vunpack.c.l.b16 %v1255
        %v1295 = vunpack.c.l.b16 %v1256
        %v1296 = vunpack.c.l.b16 %v1257
        %v1297 = vpack.c.b16 %v1282, %v1281
        %v1298 = vpack.c.b16 %v1284, %v1283
        %v1299 = vpack.c.b16 %v1286, %v1285
        %v1300 = vpack.c.b16 %v1288, %v1287
        %v1301 = vpack.c.b16 %v1290, %v1289
        %v1302 = vpack.c.b16 %v1292, %v1291
        %v1303 = vpack.c.b16 %v1294, %v1293
        %v1304 = vpack.c.b16 %v1296, %v1295
        %1313 = vmatprep.subr.bf16.mxu0 0
        %1314 = vmatpush1.bf16.msra.mxu0 %v1297
        %1315 = vmatprep.subr.bf16.mxu0 0
        %1316 = vmatpush1.bf16.msra.mxu0 %v1298
        %1317 = vmatprep.subr.bf16.mxu0 0
        %1318 = vmatpush1.bf16.msra.mxu0 %v1299
        %1319 = vmatprep.subr.bf16.mxu0 0
        %1320 = vmatpush1.bf16.msra.mxu0 %v1300
        %1321 = vmatprep.subr.bf16.mxu0 0
        %1322 = vmatpush1.bf16.msra.mxu0 %v1301
        %1323 = vmatprep.subr.bf16.mxu0 0
        %1324 = vmatpush1.bf16.msra.mxu0 %v1302
        %1325 = vmatprep.subr.bf16.mxu0 0
        %1326 = vmatpush1.bf16.msra.mxu0 %v1303
        %1327 = vmatprep.subr.bf16.mxu0 0
        %1328 = vmatpush1.bf16.msra.mxu0 %v1304
        %1329 = vmatprep.subr.bf16.mxu0 0
        %1330 = vmatpush1.bf16.msra.mxu0 0
        %1331 = vmatprep.subr.bf16.mxu0 0
        %1332 = vmatpush1.bf16.msra.mxu0 0
        %1333 = vmatprep.subr.bf16.mxu0 0
        %1334 = vmatpush1.bf16.msra.mxu0 0
        %1335 = vmatprep.subr.bf16.mxu0 0
        %1336 = vmatpush1.bf16.msra.mxu0 0
        %1337 = vmatprep.subr.bf16.mxu0 0
        %1338 = vmatpush1.bf16.msra.mxu0 0
        %1339 = vmatprep.subr.bf16.mxu0 0
        %1340 = vmatpush1.bf16.msra.mxu0 0
        %1341 = vmatprep.subr.bf16.mxu0 0
        %1342 = vmatpush1.bf16.msra.mxu0 0
        %1343 = vmatprep.subr.bf16.mxu0 0
        %1344 = vmatpush1.bf16.msra.mxu0 0
        %1345 = vmatprep.mubr.bf16.mxu0 0
        %1346 = vmatmul.mubr.bf16.gmra.mrb[0].mxu0 %v1237
        %v1347 = vpop.f32.mrb[0].mxu0
        %v1348 = vadd.f32 %v1263, %v1347
        %v1349 = vpop.f32.mrb[0].mxu0
        %v1350 = vpop.f32.mrb[0].mxu0
        %v1351 = vadd.f32 %v1263, %v1350
        %v1352 = vpop.f32.mrb[0].mxu0
        %1353 = vmatprep.mubr.bf16.mxu0 0
        %1354 = vmatmul.mubr.bf16.gmra.mrb[0].mxu0 %v1238
        %v1355 = vpop.f32.mrb[0].mxu0
        %v1356 = vadd.f32 %v1263, %v1355
        %v1357 = vpop.f32.mrb[0].mxu0
        %v1358 = vpop.f32.mrb[0].mxu0
        %v1359 = vadd.f32 %v1263, %v1358
        %v1360 = vpop.f32.mrb[0].mxu0
        %1361 = vmatprep.mubr.bf16.mxu0 0
        %1362 = vmatmul.mubr.bf16.gmra.mrb[0].mxu0 %v1239
        %v1363 = vpop.f32.mrb[0].mxu0
        %v1364 = vadd.f32 %v1263, %v1363
        %v1365 = vpop.f32.mrb[0].mxu0
        %v1366 = vpop.f32.mrb[0].mxu0
        %v1367 = vadd.f32 %v1263, %v1366
        %v1368 = vpop.f32.mrb[0].mxu0
        %1369 = vmatprep.mubr.bf16.mxu0 0
        %1370 = vmatmul.mubr.bf16.gmra.mrb[0].mxu0 %v1240
        %v1371 = vpop.f32.mrb[0].mxu0
        %v1372 = vadd.f32 %v1263, %v1371
        %v1373 = vpop.f32.mrb[0].mxu0
        %v1374 = vpop.f32.mrb[0].mxu0
        %v1375 = vadd.f32 %v1263, %v1374
        %v1376 = vpop.f32.mrb[0].mxu0
        %1377 = vmatprep.mubr.bf16.mxu0 0
        %1378 = vmatmul.mubr.bf16.gmra.mrb[0].mxu0 %v1241
        %v1379 = vpop.f32.mrb[0].mxu0
        %v1380 = vadd.f32 %v1263, %v1379
        %v1381 = vpop.f32.mrb[0].mxu0
        %v1382 = vpop.f32.mrb[0].mxu0
        %v1383 = vadd.f32 %v1263, %v1382
        %v1384 = vpop.f32.mrb[0].mxu0
        %1385 = vdwg.mxu0
        %v1386 = vmax.f32 %v1348, 0.0
        %v1387 = vmax.f32 %v1351, 0.0
        %v1388 = vmax.f32 %v1356, 0.0
        %v1389 = vmax.f32 %v1359, 0.0
        %v1390 = vmax.f32 %v1364, 0.0
        %v1391 = vmax.f32 %v1367, 0.0
        %v1392 = vmax.f32 %v1372, 0.0
        %v1393 = vmax.f32 %v1375, 0.0
        %v1394 = vmax.f32 %v1380, 0.0
        %v1395 = vmax.f32 %v1383, 0.0
        %v1396 = vpack.c.bf16 %v1387, %v1386
        %v1397 = vpack.c.bf16 %v1389, %v1388
        %v1398 = vpack.c.bf16 %v1391, %v1390
        %v1399 = vpack.c.bf16 %v1393, %v1392
        %v1400 = vpack.c.bf16 %v1395, %v1394
        %v1401 = vld [vmem:[#allocation7] sm:$0xf]
        %v1402 = vld [vmem:[#allocation7 + $0x4] sm:$0xf]
        %v1403 = vld [vmem:[#allocation7 + $0x8] sm:$0xf]
        %v1404 = vld [vmem:[#allocation7 + $0xc] sm:$0xf]
        %v1405 = vld [vmem:[#allocation7 + $0x10] sm:$0xf]
        %v1406 = vld [vmem:[#allocation7 + $0x14] sm:$0xf]
        %v1407 = vld [vmem:[#allocation7 + $0x18] sm:$0xf]
        %v1408 = vld [vmem:[#allocation7 + $0x1c] sm:$0xf]
        %v1409 = vld [vmem:[#allocation7 + $0x20] sm:$0xf]
        %v1410 = vld [vmem:[#allocation7 + $0x24] sm:$0xf]
        %v1411 = vld [vmem:[#allocation7 + $0x28] sm:$0xf]
        %v1412 = vld [vmem:[#allocation7 + $0x2c] sm:$0xf]
        %v1413 = vld [vmem:[#allocation7 + $0x30] sm:$0xf]
        %v1414 = vld [vmem:[#allocation7 + $0x34] sm:$0xf]
        %v1415 = vld [vmem:[#allocation7 + $0x38] sm:$0xf]
        %v1416 = vld [vmem:[#allocation7 + $0x3c] sm:$0xf]
        %v1417 = vld [vmem:[%s6] sm:$0x1]
        %v1419 = vlaneseq
        %v1420 = vshrl.u32 %v1419, 7
        %v1421 = vsub.s32 0, %v1420
        %v1422 = vrot.slane %v1417, %v1421
        %v1440 = vunpack.c.l.b16 %v1401
        %v1441 = vunpack.c.l.b16 %v1402
        %v1442 = vunpack.c.l.b16 %v1403
        %v1443 = vunpack.c.l.b16 %v1404
        %v1444 = vunpack.c.l.b16 %v1405
        %v1445 = vunpack.c.l.b16 %v1406
        %v1446 = vunpack.c.l.b16 %v1407
        %v1447 = vunpack.c.l.b16 %v1408
        %v1448 = vunpack.c.l.b16 %v1409
        %v1449 = vunpack.c.l.b16 %v1410
        %v1450 = vunpack.c.l.b16 %v1411
        %v1451 = vunpack.c.l.b16 %v1412
        %v1452 = vunpack.c.l.b16 %v1413
        %v1453 = vunpack.c.l.b16 %v1414
        %v1454 = vunpack.c.l.b16 %v1415
        %v1455 = vunpack.c.l.b16 %v1416
        %v1456 = vpack.c.b16 %v1441, %v1440
        %v1457 = vpack.c.b16 %v1443, %v1442
        %v1458 = vpack.c.b16 %v1445, %v1444
        %v1459 = vpack.c.b16 %v1447, %v1446
        %v1460 = vpack.c.b16 %v1449, %v1448
        %v1461 = vpack.c.b16 %v1451, %v1450
        %v1462 = vpack.c.b16 %v1453, %v1452
        %v1463 = vpack.c.b16 %v1455, %v1454
        %1472 = vmatprep.subr.bf16.mxu0 0
        %1473 = vmatpush1.bf16.msra.mxu0 %v1456
        %1474 = vmatprep.subr.bf16.mxu0 0
        %1475 = vmatpush1.bf16.msra.mxu0 %v1457
        %1476 = vmatprep.subr.bf16.mxu0 0
        %1477 = vmatpush1.bf16.msra.mxu0 %v1458
        %1478 = vmatprep.subr.bf16.mxu0 0
        %1479 = vmatpush1.bf16.msra.mxu0 %v1459
        %1480 = vmatprep.subr.bf16.mxu0 0
        %1481 = vmatpush1.bf16.msra.mxu0 %v1460
        %1482 = vmatprep.subr.bf16.mxu0 0
        %1483 = vmatpush1.bf16.msra.mxu0 %v1461
        %1484 = vmatprep.subr.bf16.mxu0 0
        %1485 = vmatpush1.bf16.msra.mxu0 %v1462
        %1486 = vmatprep.subr.bf16.mxu0 0
        %1487 = vmatpush1.bf16.msra.mxu0 %v1463
        %1488 = vmatprep.subr.bf16.mxu0 0
        %1489 = vmatpush1.bf16.msra.mxu0 0
        %1490 = vmatprep.subr.bf16.mxu0 0
        %1491 = vmatpush1.bf16.msra.mxu0 0
        %1492 = vmatprep.subr.bf16.mxu0 0
        %1493 = vmatpush1.bf16.msra.mxu0 0
        %1494 = vmatprep.subr.bf16.mxu0 0
        %1495 = vmatpush1.bf16.msra.mxu0 0
        %1496 = vmatprep.subr.bf16.mxu0 0
        %1497 = vmatpush1.bf16.msra.mxu0 0
        %1498 = vmatprep.subr.bf16.mxu0 0
        %1499 = vmatpush1.bf16.msra.mxu0 0
        %1500 = vmatprep.subr.bf16.mxu0 0
        %1501 = vmatpush1.bf16.msra.mxu0 0
        %1502 = vmatprep.subr.bf16.mxu0 0
        %1503 = vmatpush1.bf16.msra.mxu0 0
        %1504 = vmatprep.mubr.bf16.mxu0 0
        %1505 = vmatmul.mubr.bf16.gmra.mrb[0].mxu0 %v1396
        %v1506 = vpop.f32.mrb[0].mxu0
        %v1507 = vadd.f32 %v1422, %v1506
        %v1508 = vpop.f32.mrb[0].mxu0
        %v1509 = vpop.f32.mrb[0].mxu0
        %v1510 = vadd.f32 %v1422, %v1509
        %v1511 = vpop.f32.mrb[0].mxu0
        %1512 = vmatprep.mubr.bf16.mxu0 0
        %1513 = vmatmul.mubr.bf16.gmra.mrb[0].mxu0 %v1397
        %v1514 = vpop.f32.mrb[0].mxu0
        %v1515 = vadd.f32 %v1422, %v1514
        %v1516 = vpop.f32.mrb[0].mxu0
        %v1517 = vpop.f32.mrb[0].mxu0
        %v1518 = vadd.f32 %v1422, %v1517
        %v1519 = vpop.f32.mrb[0].mxu0
        %1520 = vmatprep.mubr.bf16.mxu0 0
        %1521 = vmatmul.mubr.bf16.gmra.mrb[0].mxu0 %v1398
        %v1522 = vpop.f32.mrb[0].mxu0
        %v1523 = vadd.f32 %v1422, %v1522
        %v1524 = vpop.f32.mrb[0].mxu0
        %v1525 = vpop.f32.mrb[0].mxu0
        %v1526 = vadd.f32 %v1422, %v1525
        %v1527 = vpop.f32.mrb[0].mxu0
        %1528 = vmatprep.mubr.bf16.mxu0 0
        %1529 = vmatmul.mubr.bf16.gmra.mrb[0].mxu0 %v1399
        %v1530 = vpop.f32.mrb[0].mxu0
        %v1531 = vadd.f32 %v1422, %v1530
        %v1532 = vpop.f32.mrb[0].mxu0
        %v1533 = vpop.f32.mrb[0].mxu0
        %v1534 = vadd.f32 %v1422, %v1533
        %v1535 = vpop.f32.mrb[0].mxu0
        %1536 = vmatprep.mubr.bf16.mxu0 0
        %1537 = vmatmul.mubr.bf16.gmra.mrb[0].mxu0 %v1400
        %v1538 = vpop.f32.mrb[0].mxu0
        %v1539 = vadd.f32 %v1422, %v1538
        %v1540 = vpop.f32.mrb[0].mxu0
        %v1541 = vpop.f32.mrb[0].mxu0
        %v1542 = vadd.f32 %v1422, %v1541
        %v1543 = vpop.f32.mrb[0].mxu0
        %1544 = vdwg.mxu0
        %v1545 = vmax.f32 %v1507, 0.0
        %v1546 = vmax.f32 %v1510, 0.0
        %v1547 = vmax.f32 %v1515, 0.0
        %v1548 = vmax.f32 %v1518, 0.0
        %v1549 = vmax.f32 %v1523, 0.0
        %v1550 = vmax.f32 %v1526, 0.0
        %v1551 = vmax.f32 %v1531, 0.0
        %v1552 = vmax.f32 %v1534, 0.0
        %v1553 = vmax.f32 %v1539, 0.0
        %v1554 = vmax.f32 %v1542, 0.0
        %v1555 = vpack.c.bf16 %v1546, %v1545
        %v1556 = vpack.c.bf16 %v1548, %v1547
        %v1557 = vpack.c.bf16 %v1550, %v1549
        %v1558 = vpack.c.bf16 %v1552, %v1551
        %v1559 = vpack.c.bf16 %v1554, %v1553
        %v1560 = vld [vmem:[#allocation9] sm:$0xf]
        %v1561 = vld [vmem:[#allocation9 + $0x4] sm:$0xf]
        %v1562 = vld [vmem:[#allocation9 + $0x8] sm:$0xf]
        %v1563 = vld [vmem:[#allocation9 + $0xc] sm:$0xf]
        %v1564 = vld [vmem:[#allocation9 + $0x10] sm:$0xf]
        %v1565 = vld [vmem:[#allocation9 + $0x14] sm:$0xf]
        %v1566 = vld [vmem:[#allocation9 + $0x18] sm:$0xf]
        %v1567 = vld [vmem:[#allocation9 + $0x1c] sm:$0xf]
        %v1568 = vld [vmem:[#allocation9 + $0x20] sm:$0xf]
        %v1569 = vld [vmem:[#allocation9 + $0x24] sm:$0xf]
        %v1570 = vld [vmem:[#allocation9 + $0x28] sm:$0xf]
        %v1571 = vld [vmem:[#allocation9 + $0x2c] sm:$0xf]
        %v1572 = vld [vmem:[#allocation9 + $0x30] sm:$0xf]
        %v1573 = vld [vmem:[#allocation9 + $0x34] sm:$0xf]
        %v1574 = vld [vmem:[#allocation9 + $0x38] sm:$0xf]
        %v1575 = vld [vmem:[#allocation9 + $0x3c] sm:$0xf]
        %v1576 = vld [vmem:[%s8] sm:$0x1]
        %v1578 = vlaneseq
        %v1579 = vshrl.u32 %v1578, 7
        %v1580 = vsub.s32 0, %v1579
        %v1581 = vrot.slane %v1576, %v1580
        %v1599 = vunpack.c.l.b16 %v1560
        %v1600 = vunpack.c.l.b16 %v1561
        %v1601 = vunpack.c.l.b16 %v1562
        %v1602 = vunpack.c.l.b16 %v1563
        %v1603 = vunpack.c.l.b16 %v1564
        %v1604 = vunpack.c.l.b16 %v1565
        %v1605 = vunpack.c.l.b16 %v1566
        %v1606 = vunpack.c.l.b16 %v1567
        %v1607 = vunpack.c.l.b16 %v1568
        %v1608 = vunpack.c.l.b16 %v1569
        %v1609 = vunpack.c.l.b16 %v1570
        %v1610 = vunpack.c.l.b16 %v1571
        %v1611 = vunpack.c.l.b16 %v1572
        %v1612 = vunpack.c.l.b16 %v1573
        %v1613 = vunpack.c.l.b16 %v1574
        %v1614 = vunpack.c.l.b16 %v1575
        %v1615 = vpack.c.b16 %v1600, %v1599
        %v1616 = vpack.c.b16 %v1602, %v1601
        %v1617 = vpack.c.b16 %v1604, %v1603
        %v1618 = vpack.c.b16 %v1606, %v1605
        %v1619 = vpack.c.b16 %v1608, %v1607
        %v1620 = vpack.c.b16 %v1610, %v1609
        %v1621 = vpack.c.b16 %v1612, %v1611
        %v1622 = vpack.c.b16 %v1614, %v1613
        %1631 = vmatprep.subr.bf16.mxu0 0
        %1632 = vmatpush1.bf16.msra.mxu0 %v1615
        %1633 = vmatprep.subr.bf16.mxu0 0
        %1634 = vmatpush1.bf16.msra.mxu0 %v1616
        %1635 = vmatprep.subr.bf16.mxu0 0
        %1636 = vmatpush1.bf16.msra.mxu0 %v1617
        %1637 = vmatprep.subr.bf16.mxu0 0
        %1638 = vmatpush1.bf16.msra.mxu0 %v1618
        %1639 = vmatprep.subr.bf16.mxu0 0
        %1640 = vmatpush1.bf16.msra.mxu0 %v1619
        %1641 = vmatprep.subr.bf16.mxu0 0
        %1642 = vmatpush1.bf16.msra.mxu0 %v1620
        %1643 = vmatprep.subr.bf16.mxu0 0
        %1644 = vmatpush1.bf16.msra.mxu0 %v1621
        %1645 = vmatprep.subr.bf16.mxu0 0
        %1646 = vmatpush1.bf16.msra.mxu0 %v1622
        %1647 = vmatprep.subr.bf16.mxu0 0
        %1648 = vmatpush1.bf16.msra.mxu0 0
        %1649 = vmatprep.subr.bf16.mxu0 0
        %1650 = vmatpush1.bf16.msra.mxu0 0
        %1651 = vmatprep.subr.bf16.mxu0 0
        %1652 = vmatpush1.bf16.msra.mxu0 0
        %1653 = vmatprep.subr.bf16.mxu0 0
        %1654 = vmatpush1.bf16.msra.mxu0 0
        %1655 = vmatprep.subr.bf16.mxu0 0
        %1656 = vmatpush1.bf16.msra.mxu0 0
        %1657 = vmatprep.subr.bf16.mxu0 0
        %1658 = vmatpush1.bf16.msra.mxu0 0
        %1659 = vmatprep.subr.bf16.mxu0 0
        %1660 = vmatpush1.bf16.msra.mxu0 0
        %1661 = vmatprep.subr.bf16.mxu0 0
        %1662 = vmatpush1.bf16.msra.mxu0 0
        %1663 = vmatprep.mubr.bf16.mxu0 0
        %1664 = vmatmul.mubr.bf16.gmra.mrb[0].mxu0 %v1555
        %v1665 = vpop.f32.mrb[0].mxu0
        %v1666 = vadd.f32 %v1581, %v1665
        %v1667 = vpop.f32.mrb[0].mxu0
        %v1668 = vpop.f32.mrb[0].mxu0
        %v1669 = vadd.f32 %v1581, %v1668
        %v1670 = vpop.f32.mrb[0].mxu0
        %1671 = vmatprep.mubr.bf16.mxu0 0
        %1672 = vmatmul.mubr.bf16.gmra.mrb[0].mxu0 %v1556
        %v1673 = vpop.f32.mrb[0].mxu0
        %v1674 = vadd.f32 %v1581, %v1673
        %v1675 = vpop.f32.mrb[0].mxu0
        %v1676 = vpop.f32.mrb[0].mxu0
        %v1677 = vadd.f32 %v1581, %v1676
        %v1678 = vpop.f32.mrb[0].mxu0
        %1679 = vmatprep.mubr.bf16.mxu0 0
        %1680 = vmatmul.mubr.bf16.gmra.mrb[0].mxu0 %v1557
        %v1681 = vpop.f32.mrb[0].mxu0
        %v1682 = vadd.f32 %v1581, %v1681
        %v1683 = vpop.f32.mrb[0].mxu0
        %v1684 = vpop.f32.mrb[0].mxu0
        %v1685 = vadd.f32 %v1581, %v1684
        %v1686 = vpop.f32.mrb[0].mxu0
        %1687 = vmatprep.mubr.bf16.mxu0 0
        %1688 = vmatmul.mubr.bf16.gmra.mrb[0].mxu0 %v1558
        %v1689 = vpop.f32.mrb[0].mxu0
        %v1690 = vadd.f32 %v1581, %v1689
        %v1691 = vpop.f32.mrb[0].mxu0
        %v1692 = vpop.f32.mrb[0].mxu0
        %v1693 = vadd.f32 %v1581, %v1692
        %v1694 = vpop.f32.mrb[0].mxu0
        %1695 = vmatprep.mubr.bf16.mxu0 0
        %1696 = vmatmul.mubr.bf16.gmra.mrb[0].mxu0 %v1559
        %v1697 = vpop.f32.mrb[0].mxu0
        %v1698 = vadd.f32 %v1581, %v1697
        %v1699 = vpop.f32.mrb[0].mxu0
        %v1700 = vpop.f32.mrb[0].mxu0
        %v1701 = vadd.f32 %v1581, %v1700
        %v1702 = vpop.f32.mrb[0].mxu0
        %1703 = vdwg.mxu0
        %v1704 = vpack.c.bf16 %v1669, %v1666
        %v1705 = vpack.c.bf16 %v1677, %v1674
        %v1706 = vpack.c.bf16 %v1685, %v1682
        %v1707 = vpack.c.bf16 %v1693, %v1690
        %v1708 = vpack.c.bf16 %v1701, %v1698
        %v1714 = vunpack.c.l.b16 %v1704
        %v1715 = vunpack.c.h.b16 %v1704
        %v1716 = vunpack.c.l.b16 %v1705
        %v1717 = vunpack.c.h.b16 %v1705
        %v1718 = vunpack.c.l.b16 %v1706
        %v1719 = vunpack.c.h.b16 %v1706
        %v1720 = vunpack.c.l.b16 %v1707
        %v1721 = vunpack.c.h.b16 %v1707
        %v1722 = vunpack.c.l.b16 %v1708
        %v1723 = vunpack.c.h.b16 %v1708
        %v1724 = vpack.c.b16 %v1714, %v1714
        %v1725 = vpack.c.b16 %v1715, %v1715
        %v1726 = vpack.c.b16 %v1716, %v1716
        %v1727 = vpack.c.b16 %v1717, %v1717
        %v1728 = vpack.c.b16 %v1718, %v1718
        %v1729 = vpack.c.b16 %v1719, %v1719
        %v1730 = vpack.c.b16 %v1720, %v1720
        %v1731 = vpack.c.b16 %v1721, %v1721
        %v1732 = vpack.c.b16 %v1722, %v1722
        %v1733 = vpack.c.b16 %v1723, %v1723
        %1744 = vst [vmem:[%s412] sm:$0xf] %v1724
        %1745 = vst [vmem:[%s412 + $0x4] sm:$0xf] %v1725
        %1746 = vst [vmem:[%s412 + $0x8] sm:$0xf] %v1726
        %1747 = vst [vmem:[%s412 + $0xc] sm:$0xf] %v1727
        %1748 = vst [vmem:[%s412 + $0x10] sm:$0xf] %v1728
        %1749 = vst [vmem:[%s412 + $0x14] sm:$0xf] %v1729
        %1750 = vst [vmem:[%s412 + $0x18] sm:$0xf] %v1730
        %1751 = vst [vmem:[%s412 + $0x1c] sm:$0xf] %v1731
        %1752 = vst [vmem:[%s412 + $0x20] sm:$0xf] %v1732
        %1753 = vst [vmem:[%s412 + $0x24] sm:$0xf] %v1733
        %s1754 = smul.u32 10, %s25
        %p1755 = scmp.lt.s32.totalorder %s1754, 19
        %s1756 = scalar_select %p1755, %s1754, 19
        %s1757 = smul.addr %s1756, 4
        %s1758 = scalar_lea.vmem %s9, %s1757
        // Predicated region
        $region77: #{quantized_very_net.1} parent=55 // pred_check
          %p1759 = pneg %p237
        $region78: #{quantized_very_net.1} parent=55 // pred_check_branch
          %1761 = sbr.rel (%p1759) target = $region80
        $region79: #{quantized_very_net.1} parent=55 // pred_region
          %s1762 = smul.u32 10, %s25
        $region80: #{quantized_very_net.1} parent=55 // pred_fallthru
          _
      $region56: #{quantized_very_net.1} parent=5 // pred_fallthru
        _
      %p1763 = scmp.le.s32.totalorder 2, %s20
      // Predicated region
      $region81: #{quantized_very_net.1} parent=5 // pred_check
        %p1764 = pneg %p1763
      $region82: #{quantized_very_net.1} parent=5 // pred_check_branch
        %1766 = sbr.rel (%p1764) target = $region84
      $region83: #{quantized_very_net.1} parent=5 // pred_region
        %s1767 = ssub.s32 %s20, 2
        // Predicated region
        $region85: #{quantized_very_net.1} parent=83 // pred_check
          %p1768 = pneg %p243
        $region86: #{quantized_very_net.1} parent=83 // pred_check_branch
          %1770 = sbr.rel (%p1768) target = $region88
        $region87: #{quantized_very_net.1} parent=83 // pred_region
          %s1771 = smul.u32 10, %s26
          %p1772 = scmp.lt.s32.totalorder %s1771, 19
          %s1773 = scalar_select %p1772, %s1771, 19
          %s1774 = smul.addr %s1773, 4
          %s1775 = scalar_lea.vmem %s9, %s1774
        $region88: #{quantized_very_net.1} parent=83 // pred_fallthru
          _
      $region84: #{quantized_very_net.1} parent=5 // pred_fallthru
        _
    $region6: #{quantized_very_net.1} parent=1 // loop_footer
      %s24 = sadd.s32 1, %s20
    $region7: #{quantized_very_net.1} parent=1 // loop_footer_branch
      %19 = sbr.rel target = $region3
    $region8: #{quantized_very_net.1} parent=1 // loop_exit
      _
    %1776 = vsyncpa [#allocation3], 1
    %s1777 = scalar_lea.sflag [#allocation3], 1
    %1778 = vsyncpa %s1777, 1
    %1779 = vsyncpa [#allocation5], 1
    %1780 = vsyncpa [#allocation8], 1

</llo_original>
